<compile_context>
chip_gen: v6e
topology: v6e:2x2x1
jax: 0.10.0
libtpu: 0.0.40
codegen_flags: <defaults>
</compile_context>

<pallas_src>
import math
import functools

import jax
import jax.numpy as jnp
from jax import lax
from jax.experimental import pallas as pl
from jax.experimental.pallas import tpu as pltpu

F32 = jnp.float32
BF16 = jnp.bfloat16
NEG_INF = -1e30  # finite "masked" value (safe under max-subtraction / bf16)


# ----------------------------- in-kernel helpers ---------------------------------
def _ln(z, w, b, eps=1e-5):
    mu = jnp.mean(z, axis=-1, keepdims=True)
    var = jnp.mean(jnp.square(z - mu), axis=-1, keepdims=True)
    return (z - mu) * lax.rsqrt(var + eps) * w + b


def _mm_t(a, w):
    # a @ w.T (PyTorch Linear convention: w is [out, in]); bf16 operands, f32 accumulate.
    return lax.dot_general(a.astype(BF16), w.astype(BF16),
                           (((1,), (1,)), ((), ())),
                           preferred_element_type=F32)


# ------------------------------ fused kernel -------------------------------------
def fused_transformer_kernel(x_ref, pe_ref, w_in_ref, w_out_ref, w_ffn1_ref,
                             w_ffn2_ref, vec_ref, b1_ref, dec_w_ref, dec_b_ref,
                             o_ref, h_scr, *, S, D, H, scale):
    l = pl.program_id(1)
    hd = D // H
    inv_sqrt_hd = 1.0 / math.sqrt(hd)

    # --- layer 0 prologue: embedding scale + positional encoding -------------------
    @pl.when(l == 0)
    def _():
        # TODO(synk): nn.Dropout(p=dropout) after the PE add is eval-mode identity here.
        h_scr[...] = x_ref[...][0] * scale + pe_ref[...]

    x = h_scr[...]                                        # (S, D) f32, VMEM-resident

    # packed per-layer vectors: [bq, bk, bv, bo, ln1w, ln1b, b2, ln2w, ln2b]
    vecs = vec_ref[...][0]                                # (9, D) f32
    bq, bk, bv, bo = vecs[0], vecs[1], vecs[2], vecs[3]
    ln1w, ln1b = vecs[4], vecs[5]
    b2 = vecs[6]
    ln2w, ln2b = vecs[7], vecs[8]
    b1 = b1_ref[...][0, 0]                                # (nhid,)

    # --- self-attention --------------------------------------------------------------
    w_in = w_in_ref[...][0]                               # (3D, D) bf16 (QKV stacked)
    q = _mm_t(x, w_in[:D]) + bq                           # (S, D) f32
    k = _mm_t(x, w_in[D:2 * D]) + bk
    v = _mm_t(x, w_in[2 * D:]) + bv

    # batched over heads: (S, D) -> (H, S, hd)
    qh = (q.reshape(S, H, hd).transpose(1, 0, 2) * inv_sqrt_hd).astype(BF16)
    kh = k.reshape(S, H, hd).transpose(1, 0, 2).astype(BF16)
    vh = v.reshape(S, H, hd).transpose(1, 0, 2).astype(BF16)

    s = jnp.einsum('hqd,hkd->hqk', qh, kh,
                   preferred_element_type=F32)            # (H, S, S) f32

    # causal mask generated in-kernel (no HBM traffic)
    row = lax.broadcasted_iota(jnp.int32, (S, S), 0)
    col = lax.broadcasted_iota(jnp.int32, (S, S), 1)
    s = jnp.where((col <= row)[None, :, :], s, NEG_INF)

    s = s - jnp.max(s, axis=-1, keepdims=True)
    p = jnp.exp(s)
    p = p * pl.reciprocal(jnp.sum(p, axis=-1, keepdims=True), approx=True)
    # TODO(synk): attention dropout (p=dropout) is eval-mode identity here.

    ctx = jnp.einsum('hqk,hkd->hqd', p.astype(BF16), vh,
                     preferred_element_type=F32)          # (H, S, hd)
    ctx = ctx.transpose(1, 0, 2).reshape(S, D)

    attn_out = _mm_t(ctx, w_out_ref[...][0]) + bo
    h1 = _ln(x + attn_out, ln1w, ln1b)                    # residual + LayerNorm1 (post-norm)

    # --- feed-forward -----------------------------------------------------------------
    f = jnp.maximum(_mm_t(h1, w_ffn1_ref[...][0]) + b1, 0.0)   # relu
    f = _mm_t(f, w_ffn2_ref[...][0]) + b2
    h2 = _ln(h1 + f, ln2w, ln2b)                          # residual + LayerNorm2

    h_scr[...] = h2                                       # stays in VMEM for layer l+1

    # --- last layer epilogue: decoder linear + log_softmax -----------------------------
    @pl.when(l == pl.num_programs(1) - 1)
    def _():
        logits = _mm_t(h2, dec_w_ref[...]) + dec_b_ref[...][0]   # (S, T) f32
        m = jnp.max(logits, axis=-1, keepdims=True)
        z = logits - m
        logp = z - jnp.log(jnp.sum(jnp.exp(z), axis=-1, keepdims=True))
        o_ref[...] = logp[None]


# --------------------------------- wrappers --------------------------------------
def init_params(key, ntoken, ninp, nhead, nhid, nlayers):
    """Deterministic synthetic parameters matching the module's shapes (stacked per layer)."""
    assert ninp % nhead == 0 and ninp % 2 == 0
    initrange = 0.1
    keys = jax.random.split(key, 2 + nlayers)

    def u(k, shape):
        return jax.random.uniform(k, shape, F32, -initrange, initrange)

    w_in, w_out, w_ffn1, w_ffn2, vecs, b1s = [], [], [], [], [], []
    for l in range(nlayers):
        ks = jax.random.split(keys[2 + l], 6)
        w_in.append(jnp.concatenate([u(ks[0], (ninp, ninp)),
                                     u(ks[1], (ninp, ninp)),
                                     u(ks[2], (ninp, ninp))], axis=0))   # (3D, D)
        w_out.append(u(ks[3], (ninp, ninp)))
        w_ffn1.append(u(ks[4], (nhid, ninp)))
        w_ffn2.append(u(ks[5], (ninp, nhid)))
        # [bq, bk, bv, bo, ln1w, ln1b, b2, ln2w, ln2b]
        vecs.append(jnp.stack(
            [jnp.zeros((ninp,), F32)] * 4
            + [jnp.ones((ninp,), F32), jnp.zeros((ninp,), F32),
               jnp.zeros((ninp,), F32),
               jnp.ones((ninp,), F32), jnp.zeros((ninp,), F32)], axis=0))
        b1s.append(jnp.zeros((1, nhid), F32))

    return {
        "emb": u(keys[0], (ntoken, ninp)),                  # nn.Embedding weight (f32)
        "dec_w": u(keys[1], (ntoken, ninp)).astype(BF16),   # decoder Linear weight (bf16)
        "dec_b": jnp.zeros((1, ntoken), F32),               # decoder Linear bias
        "w_in": jnp.stack(w_in).astype(BF16),               # (L, 3D, D)
        "w_out": jnp.stack(w_out).astype(BF16),             # (L, D, D)
        "w_ffn1": jnp.stack(w_ffn1).astype(BF16),           # (L, nhid, D)
        "w_ffn2": jnp.stack(w_ffn2).astype(BF16),           # (L, D, nhid)
        "vecs": jnp.stack(vecs),                            # (L, 9, D) f32
        "b1": jnp.stack(b1s)[:, None, 0, :][:, :, :],       # (L, 1, nhid) f32
    }


def transformer_forward(params, src, *, nhead):
    """src: int32 tokens [seq, batch] (PyTorch convention). Returns [seq, batch, ntoken]."""
    S, N = src.shape
    D = params["emb"].shape[1]
    T = params["dec_w"].shape[0]
    L = params["w_in"].shape[0]
    nhid = params["b1"].shape[-1]

    # Embedding token gather stays in JAX glue.
    x = jnp.take(params["emb"], src, axis=0)               # (S, N, D)
    x = jnp.transpose(x, (1, 0, 2)).astype(F32)            # (N, S, D) kernel layout

    # sinusoidal positional-encoding table, identical to PositionalEncoding.__init__
    pos = jnp.arange(S, dtype=F32)[:, None]
    div = jnp.exp(jnp.arange(0, D, 2, dtype=F32) * (-math.log(10000.0) / D))
    pe = jnp.stack([jnp.sin(pos * div), jnp.cos(pos * div)], axis=-1).reshape(S, D)

    kernel = functools.partial(fused_transformer_kernel, S=S, D=D, H=nhead,
                               scale=math.sqrt(D))

    out = pl.pallas_call(
        kernel,
        out_shape=jax.ShapeDtypeStruct((N, S, T), F32),
        grid_spec=pltpu.PrefetchScalarGridSpec(
            num_scalar_prefetch=0,
            grid=(N, L),                                   # batch parallel, layers sequential
            in_specs=[
                pl.BlockSpec((1, S, D), lambda n, l: (n, 0, 0)),        # x (embeddings)
                pl.BlockSpec((S, D), lambda n, l: (0, 0)),              # pe table
                pl.BlockSpec((1, 3 * D, D), lambda n, l: (l, 0, 0)),    # QKV weights
                pl.BlockSpec((1, D, D), lambda n, l: (l, 0, 0)),        # attn out proj
                pl.BlockSpec((1, nhid, D), lambda n, l: (l, 0, 0)),     # FFN w1
                pl.BlockSpec((1, D, nhid), lambda n, l: (l, 0, 0)),     # FFN w2
                pl.BlockSpec((1, 9, D), lambda n, l: (l, 0, 0)),        # packed biases/LN
                pl.BlockSpec((1, 1, nhid), lambda n, l: (l, 0, 0)),     # FFN b1
                pl.BlockSpec((T, D), lambda n, l: (0, 0)),              # decoder weight
                pl.BlockSpec((1, T), lambda n, l: (0, 0)),              # decoder bias
            ],
            out_specs=pl.BlockSpec((1, S, T), lambda n, l: (n, 0, 0)),  # written at l == L-1
            scratch_shapes=[pltpu.VMEM((S, D), F32)],                   # resident activation
        ),
        compiler_params=pltpu.CompilerParams(
            dimension_semantics=("parallel", "arbitrary")),
    )(x, pe, params["w_in"], params["w_out"], params["w_ffn1"],
      params["w_ffn2"], params["vecs"], params["b1"],
      params["dec_w"], params["dec_b"])

    return jnp.transpose(out, (1, 0, 2))                    # (S, N, ntoken)


if __name__ == "__main__":
    ntoken, ninp, nhead, nhid, nlayers = 50, 32, 2, 64, 2
    S, N = 8, 2  # seq len, batch

    key = jax.random.PRNGKey(0)
    pkey, dkey = jax.random.split(key)
    params = init_params(pkey, ntoken, ninp, nhead, nhid, nlayers)
    src = jax.random.randint(dkey, (S, N), 0, ntoken, dtype=jnp.int32)

    out = transformer_forward(params, src, nhead=nhead)
    out = jax.block_until_ready(out)
    assert out.shape == (S, N, ntoken)
    assert bool(jnp.all(jnp.isfinite(out)))
    print("KERNEL_OK")
</pallas_src>

<mosaic_0001>
module attributes {stable_mosaic.version = 11 : i64} {
  func.func @fused_transformer_kernel(%arg0: i32, %arg1: i32, %arg2: memref<1x8x32xf32, #tpu.memory_space<vmem>>, %arg3: memref<8x32xf32, #tpu.memory_space<vmem>>, %arg4: memref<1x96x32xbf16, #tpu.memory_space<vmem>>, %arg5: memref<1x32x32xbf16, #tpu.memory_space<vmem>>, %arg6: memref<1x64x32xbf16, #tpu.memory_space<vmem>>, %arg7: memref<1x32x64xbf16, #tpu.memory_space<vmem>>, %arg8: memref<1x9x32xf32, #tpu.memory_space<vmem>>, %arg9: memref<1x1x64xf32, #tpu.memory_space<vmem>>, %arg10: memref<50x32xbf16, #tpu.memory_space<vmem>>, %arg11: memref<1x50xf32, #tpu.memory_space<vmem>>, %arg12: memref<1x8x50xf32, #tpu.memory_space<vmem>>, %arg13: memref<8x32xf32, #tpu.memory_space<vmem>>) attributes {dimension_semantics = [#tpu.dimension_semantics<parallel>, #tpu.dimension_semantics<arbitrary>], iteration_bounds = array<i64: 2, 2>, scalar_prefetch = 0 : i64, scratch_operands = 1 : i64, tpu.core_type = #tpu.core_type<tc>, window_params = [{transform_indices = @transform_0, window_bounds = array<i64: 1, 8, 32>}, {pipeline_mode = #tpu.pipeline_mode<synchronous>, transform_indices = @transform_1, window_bounds = array<i64: 8, 32>}, {transform_indices = @transform_2, window_bounds = array<i64: 1, 96, 32>}, {transform_indices = @transform_3, window_bounds = array<i64: 1, 32, 32>}, {transform_indices = @transform_4, window_bounds = array<i64: 1, 64, 32>}, {transform_indices = @transform_5, window_bounds = array<i64: 1, 32, 64>}, {transform_indices = @transform_6, window_bounds = array<i64: 1, 9, 32>}, {transform_indices = @transform_7, window_bounds = array<i64: 1, 1, 64>}, {pipeline_mode = #tpu.pipeline_mode<synchronous>, transform_indices = @transform_8, window_bounds = array<i64: 50, 32>}, {pipeline_mode = #tpu.pipeline_mode<synchronous>, transform_indices = @transform_9, window_bounds = array<i64: 1, 50>}, {transform_indices = @transform_10, window_bounds = array<i64: 1, 8, 50>}]} {
    %c0_i32 = arith.constant 0 : i32
    %0 = arith.cmpi eq, %arg1, %c0_i32 : i32
    %1 = arith.extui %0 : i1 to i32
    %c0_i32_0 = arith.constant 0 : i32
    %2 = arith.cmpi ne, %1, %c0_i32_0 : i32
    scf.if %2 {
      %c0_45 = arith.constant 0 : index
      %c0_46 = arith.constant 0 : index
      %c0_47 = arith.constant 0 : index
      %157 = vector.load %arg2[%c0_45, %c0_46, %c0_47] : memref<1x8x32xf32, #tpu.memory_space<vmem>>, vector<1x8x32xf32>
      %158 = vector.shape_cast %157 : vector<1x8x32xf32> to vector<8x32xf32>
      %cst_48 = arith.constant 5.65685415 : f32
      %159 = vector.broadcast %cst_48 : f32 to vector<8x32xf32>
      %160 = arith.mulf %158, %159 : vector<8x32xf32>
      %c0_49 = arith.constant 0 : index
      %c0_50 = arith.constant 0 : index
      %161 = vector.load %arg3[%c0_49, %c0_50] : memref<8x32xf32, #tpu.memory_space<vmem>>, vector<8x32xf32>
      %162 = arith.addf %160, %161 : vector<8x32xf32>
      %c0_51 = arith.constant 0 : index
      %c0_52 = arith.constant 0 : index
      %163 = vector.load %arg13[%c0_51, %c0_52] : memref<8x32xf32, #tpu.memory_space<vmem>>, vector<8x32xf32>
      tpu.vector_store %arg13[%c0_51, %c0_52], %162 {strides = array<i32>} : memref<8x32xf32, #tpu.memory_space<vmem>>, vector<8x32xf32>,
    } else {
    }
    %c0 = arith.constant 0 : index
    %c0_1 = arith.constant 0 : index
    %3 = vector.load %arg13[%c0, %c0_1] : memref<8x32xf32, #tpu.memory_space<vmem>>, vector<8x32xf32>
    %c0_2 = arith.constant 0 : index
    %c0_3 = arith.constant 0 : index
    %c0_4 = arith.constant 0 : index
    %4 = vector.load %arg8[%c0_2, %c0_3, %c0_4] : memref<1x9x32xf32, #tpu.memory_space<vmem>>, vector<1x9x32xf32>
    %5 = vector.shape_cast %4 : vector<1x9x32xf32> to vector<9x32xf32>
    %6 = vector.extract_strided_slice %5 {offsets = [0, 0], sizes = [1, 32], strides = [1, 1]} : vector<9x32xf32> to vector<1x32xf32>
    %7 = vector.shape_cast %6 : vector<1x32xf32> to vector<32xf32>
    %8 = vector.extract_strided_slice %5 {offsets = [1, 0], sizes = [1, 32], strides = [1, 1]} : vector<9x32xf32> to vector<1x32xf32>
    %9 = vector.shape_cast %8 : vector<1x32xf32> to vector<32xf32>
    %10 = vector.extract_strided_slice %5 {offsets = [2, 0], sizes = [1, 32], strides = [1, 1]} : vector<9x32xf32> to vector<1x32xf32>
    %11 = vector.shape_cast %10 : vector<1x32xf32> to vector<32xf32>
    %12 = vector.extract_strided_slice %5 {offsets = [3, 0], sizes = [1, 32], strides = [1, 1]} : vector<9x32xf32> to vector<1x32xf32>
    %13 = vector.shape_cast %12 : vector<1x32xf32> to vector<32xf32>
    %14 = vector.extract_strided_slice %5 {offsets = [4, 0], sizes = [1, 32], strides = [1, 1]} : vector<9x32xf32> to vector<1x32xf32>
    %15 = vector.shape_cast %14 : vector<1x32xf32> to vector<32xf32>
    %16 = vector.extract_strided_slice %5 {offsets = [5, 0], sizes = [1, 32], strides = [1, 1]} : vector<9x32xf32> to vector<1x32xf32>
    %17 = vector.shape_cast %16 : vector<1x32xf32> to vector<32xf32>
    %18 = vector.extract_strided_slice %5 {offsets = [6, 0], sizes = [1, 32], strides = [1, 1]} : vector<9x32xf32> to vector<1x32xf32>
    %19 = vector.shape_cast %18 : vector<1x32xf32> to vector<32xf32>
    %20 = vector.extract_strided_slice %5 {offsets = [7, 0], sizes = [1, 32], strides = [1, 1]} : vector<9x32xf32> to vector<1x32xf32>
    %21 = vector.shape_cast %20 : vector<1x32xf32> to vector<32xf32>
    %22 = vector.extract_strided_slice %5 {offsets = [8, 0], sizes = [1, 32], strides = [1, 1]} : vector<9x32xf32> to vector<1x32xf32>
    %23 = vector.shape_cast %22 : vector<1x32xf32> to vector<32xf32>
    %c0_5 = arith.constant 0 : index
    %c0_6 = arith.constant 0 : index
    %c0_7 = arith.constant 0 : index
    %24 = vector.load %arg9[%c0_5, %c0_6, %c0_7] : memref<1x1x64xf32, #tpu.memory_space<vmem>>, vector<1x1x64xf32>
    %25 = vector.shape_cast %24 : vector<1x1x64xf32> to vector<64xf32>
    %c0_8 = arith.constant 0 : index
    %c0_9 = arith.constant 0 : index
    %c0_10 = arith.constant 0 : index
    %26 = vector.load %arg4[%c0_8, %c0_9, %c0_10] : memref<1x96x32xbf16, #tpu.memory_space<vmem>>, vector<1x96x32xbf16>
    %27 = vector.shape_cast %26 : vector<1x96x32xbf16> to vector<96x32xbf16>
    %28 = vector.extract_strided_slice %27 {offsets = [0, 0], sizes = [32, 32], strides = [1, 1]} : vector<96x32xbf16> to vector<32x32xbf16>
    %29 = arith.truncf %3 : vector<8x32xf32> to vector<8x32xbf16>
    %cst = arith.constant dense<0.000000e+00> : vector<8x32xf32>
    %30 = tpu.matmul %29, %28, %cst {dimension_numbers = #tpu.dot_dimension_numbers<[1], [1], [0], [0], [0, 0, 1, 0], [], []>} : vector<8x32xbf16>, vector<32x32xbf16>, vector<8x32xf32> -> vector<8x32xf32>
    %31 = vector.shape_cast %7 : vector<32xf32> to vector<1x32xf32>
    %32 = vector.broadcast %31 : vector<1x32xf32> to vector<8x32xf32>
    %33 = arith.addf %30, %32 : vector<8x32xf32>
    %34 = vector.extract_strided_slice %27 {offsets = [32, 0], sizes = [32, 32], strides = [1, 1]} : vector<96x32xbf16> to vector<32x32xbf16>
    %35 = arith.truncf %3 : vector<8x32xf32> to vector<8x32xbf16>
    %cst_11 = arith.constant dense<0.000000e+00> : vector<8x32xf32>
    %36 = tpu.matmul %35, %34, %cst_11 {dimension_numbers = #tpu.dot_dimension_numbers<[1], [1], [0], [0], [0, 0, 1, 0], [], []>} : vector<8x32xbf16>, vector<32x32xbf16>, vector<8x32xf32> -> vector<8x32xf32>
    %37 = vector.shape_cast %9 : vector<32xf32> to vector<1x32xf32>
    %38 = vector.broadcast %37 : vector<1x32xf32> to vector<8x32xf32>
    %39 = arith.addf %36, %38 : vector<8x32xf32>
    %40 = vector.extract_strided_slice %27 {offsets = [64, 0], sizes = [32, 32], strides = [1, 1]} : vector<96x32xbf16> to vector<32x32xbf16>
    %41 = arith.truncf %3 : vector<8x32xf32> to vector<8x32xbf16>
    %cst_12 = arith.constant dense<0.000000e+00> : vector<8x32xf32>
    %42 = tpu.matmul %41, %40, %cst_12 {dimension_numbers = #tpu.dot_dimension_numbers<[1], [1], [0], [0], [0, 0, 1, 0], [], []>} : vector<8x32xbf16>, vector<32x32xbf16>, vector<8x32xf32> -> vector<8x32xf32>
    %43 = vector.shape_cast %11 : vector<32xf32> to vector<1x32xf32>
    %44 = vector.broadcast %43 : vector<1x32xf32> to vector<8x32xf32>
    %45 = arith.addf %42, %44 : vector<8x32xf32>
    %46 = vector.shape_cast %33 : vector<8x32xf32> to vector<8x2x16xf32>
    %47 = tpu.transpose %46, [1, 0, 2] : vector<8x2x16xf32> -> vector<2x8x16xf32>
    %cst_13 = arith.constant 2.500000e-01 : f32
    %48 = vector.broadcast %cst_13 : f32 to vector<2x8x16xf32>
    %49 = arith.mulf %47, %48 : vector<2x8x16xf32>
    %50 = arith.truncf %49 : vector<2x8x16xf32> to vector<2x8x16xbf16>
    %51 = vector.shape_cast %39 : vector<8x32xf32> to vector<8x2x16xf32>
    %52 = tpu.transpose %51, [1, 0, 2] : vector<8x2x16xf32> -> vector<2x8x16xf32>
    %53 = arith.truncf %52 : vector<2x8x16xf32> to vector<2x8x16xbf16>
    %54 = vector.shape_cast %45 : vector<8x32xf32> to vector<8x2x16xf32>
    %55 = tpu.transpose %54, [1, 0, 2] : vector<8x2x16xf32> -> vector<2x8x16xf32>
    %56 = arith.truncf %55 : vector<2x8x16xf32> to vector<2x8x16xbf16>
    "tpu.trace_start"() <{level = 10 : i32, message = "hqd,hkd->hqk"}> : () -> ()
    %cst_14 = arith.constant dense<0.000000e+00> : vector<2x8x8xf32>
    %57 = tpu.matmul %50, %53, %cst_14 {dimension_numbers = #tpu.dot_dimension_numbers<[2], [2], [1], [1], [0, 0, 0, 1, 1, 1], [0], [0]>} : vector<2x8x16xbf16>, vector<2x8x16xbf16>, vector<2x8x8xf32> -> vector<2x8x8xf32>
    "tpu.trace_stop"() : () -> ()
    %58 = tpu.iota {dimensions = array<i32: 0>} : vector<8x8xi32>
    %59 = tpu.iota {dimensions = array<i32: 1>} : vector<8x8xi32>
    %60 = arith.cmpi sle, %59, %58 : vector<8x8xi32>
    %61 = vector.shape_cast %60 : vector<8x8xi1> to vector<1x8x8xi1>
    %cst_15 = arith.constant -1.000000e+30 : f32
    %62 = vector.shape_cast %61 : vector<1x8x8xi1> to vector<1x8x8xi1>
    %63 = vector.broadcast %62 : vector<1x8x8xi1> to vector<2x8x8xi1>
    %64 = vector.broadcast %cst_15 : f32 to vector<2x8x8xf32>
    %65 = arith.select %63, %57, %64 : vector<2x8x8xi1>, vector<2x8x8xf32>
    %cst_16 = arith.constant dense<0xFF800000> : vector<2x8xf32>
    %66 = vector.multi_reduction <maximumf>, %65, %cst_16 [2] : vector<2x8x8xf32> to vector<2x8xf32>
    %67 = vector.shape_cast %66 : vector<2x8xf32> to vector<2x8x1xf32>
    %68 = vector.broadcast %67 : vector<2x8x1xf32> to vector<2x8x8xf32>
    %69 = arith.subf %65, %68 : vector<2x8x8xf32>
    %70 = math.exp %69 : vector<2x8x8xf32>
    %cst_17 = arith.constant dense<0.000000e+00> : vector<2x8xf32>
    %71 = vector.multi_reduction <add>, %70, %cst_17 [2] : vector<2x8x8xf32> to vector<2x8xf32>
    %72 = vector.shape_cast %71 : vector<2x8xf32> to vector<2x8x1xf32>
    %73 = tpu.reciprocal %72 {approx = true} : vector<2x8x1xf32> -> vector<2x8x1xf32>
    %74 = vector.broadcast %73 : vector<2x8x1xf32> to vector<2x8x8xf32>
    %75 = arith.mulf %70, %74 : vector<2x8x8xf32>
    %76 = arith.truncf %75 : vector<2x8x8xf32> to vector<2x8x8xbf16>
    "tpu.trace_start"() <{level = 10 : i32, message = "hqk,hkd->hqd"}> : () -> ()
    %cst_18 = arith.constant dense<0.000000e+00> : vector<2x8x16xf32>
    %77 = tpu.matmul %76, %56, %cst_18 {dimension_numbers = #tpu.dot_dimension_numbers<[2], [1], [1], [2], [0, 0, 0, 1, 1, 2], [0], [0]>} : vector<2x8x8xbf16>, vector<2x8x16xbf16>, vector<2x8x16xf32> -> vector<2x8x16xf32>
    "tpu.trace_stop"() : () -> ()
    %78 = tpu.transpose %77, [1, 0, 2] : vector<2x8x16xf32> -> vector<8x2x16xf32>
    %79 = vector.shape_cast %78 : vector<8x2x16xf32> to vector<8x32xf32>
    %c0_19 = arith.constant 0 : index
    %c0_20 = arith.constant 0 : index
    %c0_21 = arith.constant 0 : index
    %80 = vector.load %arg5[%c0_19, %c0_20, %c0_21] : memref<1x32x32xbf16, #tpu.memory_space<vmem>>, vector<1x32x32xbf16>
    %81 = vector.shape_cast %80 : vector<1x32x32xbf16> to vector<32x32xbf16>
    %82 = arith.truncf %79 : vector<8x32xf32> to vector<8x32xbf16>
    %cst_22 = arith.constant dense<0.000000e+00> : vector<8x32xf32>
    %83 = tpu.matmul %82, %81, %cst_22 {dimension_numbers = #tpu.dot_dimension_numbers<[1], [1], [0], [0], [0, 0, 1, 0], [], []>} : vector<8x32xbf16>, vector<32x32xbf16>, vector<8x32xf32> -> vector<8x32xf32>
    %84 = vector.shape_cast %13 : vector<32xf32> to vector<1x32xf32>
    %85 = vector.broadcast %84 : vector<1x32xf32> to vector<8x32xf32>
    %86 = arith.addf %83, %85 : vector<8x32xf32>
    %87 = arith.addf %3, %86 : vector<8x32xf32>
    %cst_23 = arith.constant dense<0.000000e+00> : vector<8xf32>
    %88 = vector.multi_reduction <add>, %87, %cst_23 [1] : vector<8x32xf32> to vector<8xf32>
    %89 = vector.shape_cast %88 : vector<8xf32> to vector<8x1xf32>
    %cst_24 = arith.constant 3.200000e+01 : f32
    %90 = vector.broadcast %cst_24 : f32 to vector<8x1xf32>
    %91 = arith.divf %89, %90 : vector<8x1xf32>
    %92 = vector.broadcast %91 : vector<8x1xf32> to vector<8x32xf32>
    %93 = arith.subf %87, %92 : vector<8x32xf32>
    %94 = arith.mulf %93, %93 : vector<8x32xf32>
    %cst_25 = arith.constant dense<0.000000e+00> : vector<8xf32>
    %95 = vector.multi_reduction <add>, %94, %cst_25 [1] : vector<8x32xf32> to vector<8xf32>
    %96 = vector.shape_cast %95 : vector<8xf32> to vector<8x1xf32>
    %cst_26 = arith.constant 3.200000e+01 : f32
    %97 = vector.broadcast %cst_26 : f32 to vector<8x1xf32>
    %98 = arith.divf %96, %97 : vector<8x1xf32>
    %99 = vector.broadcast %91 : vector<8x1xf32> to vector<8x32xf32>
    %100 = arith.subf %87, %99 : vector<8x32xf32>
    %cst_27 = arith.constant 9.99999974E-6 : f32
    %101 = vector.broadcast %cst_27 : f32 to vector<8x1xf32>
    %102 = arith.addf %98, %101 : vector<8x1xf32>
    %103 = math.rsqrt %102 : vector<8x1xf32>
    %104 = vector.broadcast %103 : vector<8x1xf32> to vector<8x32xf32>
    %105 = arith.mulf %100, %104 : vector<8x32xf32>
    %106 = vector.shape_cast %15 : vector<32xf32> to vector<1x32xf32>
    %107 = vector.broadcast %106 : vector<1x32xf32> to vector<8x32xf32>
    %108 = arith.mulf %105, %107 : vector<8x32xf32>
    %109 = vector.shape_cast %17 : vector<32xf32> to vector<1x32xf32>
    %110 = vector.broadcast %109 : vector<1x32xf32> to vector<8x32xf32>
    %111 = arith.addf %108, %110 : vector<8x32xf32>
    %c0_28 = arith.constant 0 : index
    %c0_29 = arith.constant 0 : index
    %c0_30 = arith.constant 0 : index
    %112 = vector.load %arg6[%c0_28, %c0_29, %c0_30] : memref<1x64x32xbf16, #tpu.memory_space<vmem>>, vector<1x64x32xbf16>
    %113 = vector.shape_cast %112 : vector<1x64x32xbf16> to vector<64x32xbf16>
    %114 = arith.truncf %111 : vector<8x32xf32> to vector<8x32xbf16>
    %cst_31 = arith.constant dense<0.000000e+00> : vector<8x64xf32>
    %115 = tpu.matmul %114, %113, %cst_31 {dimension_numbers = #tpu.dot_dimension_numbers<[1], [1], [0], [0], [0, 0, 1, 0], [], []>} : vector<8x32xbf16>, vector<64x32xbf16>, vector<8x64xf32> -> vector<8x64xf32>
    %116 = vector.shape_cast %25 : vector<64xf32> to vector<1x64xf32>
    %117 = vector.broadcast %116 : vector<1x64xf32> to vector<8x64xf32>
    %118 = arith.addf %115, %117 : vector<8x64xf32>
    %cst_32 = arith.constant 0.000000e+00 : f32
    %119 = vector.broadcast %cst_32 : f32 to vector<8x64xf32>
    %120 = arith.maximumf %118, %119 : vector<8x64xf32>
    %c0_33 = arith.constant 0 : index
    %c0_34 = arith.constant 0 : index
    %c0_35 = arith.constant 0 : index
    %121 = vector.load %arg7[%c0_33, %c0_34, %c0_35] : memref<1x32x64xbf16, #tpu.memory_space<vmem>>, vector<1x32x64xbf16>
    %122 = vector.shape_cast %121 : vector<1x32x64xbf16> to vector<32x64xbf16>
    %123 = arith.truncf %120 : vector<8x64xf32> to vector<8x64xbf16>
    %cst_36 = arith.constant dense<0.000000e+00> : vector<8x32xf32>
    %124 = tpu.matmul %123, %122, %cst_36 {dimension_numbers = #tpu.dot_dimension_numbers<[1], [1], [0], [0], [0, 0, 1, 0], [], []>} : vector<8x64xbf16>, vector<32x64xbf16>, vector<8x32xf32> -> vector<8x32xf32>
    %125 = vector.shape_cast %19 : vector<32xf32> to vector<1x32xf32>
    %126 = vector.broadcast %125 : vector<1x32xf32> to vector<8x32xf32>
    %127 = arith.addf %124, %126 : vector<8x32xf32>
    %128 = arith.addf %111, %127 : vector<8x32xf32>
    %cst_37 = arith.constant dense<0.000000e+00> : vector<8xf32>
    %129 = vector.multi_reduction <add>, %128, %cst_37 [1] : vector<8x32xf32> to vector<8xf32>
    %130 = vector.shape_cast %129 : vector<8xf32> to vector<8x1xf32>
    %cst_38 = arith.constant 3.200000e+01 : f32
    %131 = vector.broadcast %cst_38 : f32 to vector<8x1xf32>
    %132 = arith.divf %130, %131 : vector<8x1xf32>
    %133 = vector.broadcast %132 : vector<8x1xf32> to vector<8x32xf32>
    %134 = arith.subf %128, %133 : vector<8x32xf32>
    %135 = arith.mulf %134, %134 : vector<8x32xf32>
    %cst_39 = arith.constant dense<0.000000e+00> : vector<8xf32>
    %136 = vector.multi_reduction <add>, %135, %cst_39 [1] : vector<8x32xf32> to vector<8xf32>
    %137 = vector.shape_cast %136 : vector<8xf32> to vector<8x1xf32>
    %cst_40 = arith.constant 3.200000e+01 : f32
    %138 = vector.broadcast %cst_40 : f32 to vector<8x1xf32>
    %139 = arith.divf %137, %138 : vector<8x1xf32>
    %140 = vector.broadcast %132 : vector<8x1xf32> to vector<8x32xf32>
    %141 = arith.subf %128, %140 : vector<8x32xf32>
    %cst_41 = arith.constant 9.99999974E-6 : f32
    %142 = vector.broadcast %cst_41 : f32 to vector<8x1xf32>
    %143 = arith.addf %139, %142 : vector<8x1xf32>
    %144 = math.rsqrt %143 : vector<8x1xf32>
    %145 = vector.broadcast %144 : vector<8x1xf32> to vector<8x32xf32>
    %146 = arith.mulf %141, %145 : vector<8x32xf32>
    %147 = vector.shape_cast %21 : vector<32xf32> to vector<1x32xf32>
    %148 = vector.broadcast %147 : vector<1x32xf32> to vector<8x32xf32>
    %149 = arith.mulf %146, %148 : vector<8x32xf32>
    %150 = vector.shape_cast %23 : vector<32xf32> to vector<1x32xf32>
    %151 = vector.broadcast %150 : vector<1x32xf32> to vector<8x32xf32>
    %152 = arith.addf %149, %151 : vector<8x32xf32>
    %c0_42 = arith.constant 0 : index
    %c0_43 = arith.constant 0 : index
    %153 = vector.load %arg13[%c0_42, %c0_43] : memref<8x32xf32, #tpu.memory_space<vmem>>, vector<8x32xf32>
    tpu.vector_store %arg13[%c0_42, %c0_43], %152 {strides = array<i32>} : memref<8x32xf32, #tpu.memory_space<vmem>>, vector<8x32xf32>,
    %c1_i32 = arith.constant 1 : i32
    %154 = arith.cmpi eq, %arg1, %c1_i32 : i32
    %155 = arith.extui %154 : i1 to i32
    %c0_i32_44 = arith.constant 0 : i32
    %156 = arith.cmpi ne, %155, %c0_i32_44 : i32
    scf.if %156 {
      %c0_45 = arith.constant 0 : index
      %c0_46 = arith.constant 0 : index
      %157 = vector.load %arg10[%c0_45, %c0_46] : memref<50x32xbf16, #tpu.memory_space<vmem>>, vector<50x32xbf16>
      %158 = arith.truncf %152 : vector<8x32xf32> to vector<8x32xbf16>
      %cst_47 = arith.constant dense<0.000000e+00> : vector<8x50xf32>
      %159 = tpu.matmul %158, %157, %cst_47 {dimension_numbers = #tpu.dot_dimension_numbers<[1], [1], [0], [0], [0, 0, 1, 0], [], []>} : vector<8x32xbf16>, vector<50x32xbf16>, vector<8x50xf32> -> vector<8x50xf32>
      %c0_48 = arith.constant 0 : index
      %c0_49 = arith.constant 0 : index
      %160 = vector.load %arg11[%c0_48, %c0_49] : memref<1x50xf32, #tpu.memory_space<vmem>>, vector<1x50xf32>
      %161 = vector.shape_cast %160 : vector<1x50xf32> to vector<50xf32>
      %162 = vector.shape_cast %161 : vector<50xf32> to vector<1x50xf32>
      %163 = vector.broadcast %162 : vector<1x50xf32> to vector<8x50xf32>
      %164 = arith.addf %159, %163 : vector<8x50xf32>
      %cst_50 = arith.constant dense<0xFF800000> : vector<8xf32>
      %165 = vector.multi_reduction <maximumf>, %164, %cst_50 [1] : vector<8x50xf32> to vector<8xf32>
      %166 = vector.shape_cast %165 : vector<8xf32> to vector<8x1xf32>
      %167 = vector.broadcast %166 : vector<8x1xf32> to vector<8x50xf32>
      %168 = arith.subf %164, %167 : vector<8x50xf32>
      %169 = math.exp %168 : vector<8x50xf32>
      %cst_51 = arith.constant dense<0.000000e+00> : vector<8xf32>
      %170 = vector.multi_reduction <add>, %169, %cst_51 [1] : vector<8x50xf32> to vector<8xf32>
      %171 = vector.shape_cast %170 : vector<8xf32> to vector<8x1xf32>
      %172 = math.log %171 : vector<8x1xf32>
      %173 = vector.broadcast %172 : vector<8x1xf32> to vector<8x50xf32>
      %174 = arith.subf %168, %173 : vector<8x50xf32>
      %175 = vector.shape_cast %174 : vector<8x50xf32> to vector<1x8x50xf32>
      %c0_52 = arith.constant 0 : index
      %c0_53 = arith.constant 0 : index
      %c0_54 = arith.constant 0 : index
      %176 = vector.load %arg12[%c0_52, %c0_53, %c0_54] : memref<1x8x50xf32, #tpu.memory_space<vmem>>, vector<1x8x50xf32>
      tpu.vector_store %arg12[%c0_52, %c0_53, %c0_54], %175 {strides = array<i32>} : memref<1x8x50xf32, #tpu.memory_space<vmem>>, vector<1x8x50xf32>,
    } else {
    }
    return
  }
  func.func @transform_0(%arg0: i32, %arg1: i32) -> (i32, i32, i32) {
    %c0_i32 = arith.constant 0 : i32
    %c0_i32_0 = arith.constant 0 : i32
    %c0_i32_1 = arith.constant 0 : i32
    return %arg0, %c0_i32, %c0_i32_0 : i32, i32, i32
  }
  func.func @transform_1(%arg0: i32, %arg1: i32) -> (i32, i32) {
    %c0_i32 = arith.constant 0 : i32
    %c0_i32_0 = arith.constant 0 : i32
    %c0_i32_1 = arith.constant 0 : i32
    return %c0_i32, %c0_i32_0 : i32, i32
  }
  func.func @transform_2(%arg0: i32, %arg1: i32) -> (i32, i32, i32) {
    %c0_i32 = arith.constant 0 : i32
    %c0_i32_0 = arith.constant 0 : i32
    %c0_i32_1 = arith.constant 0 : i32
    return %arg1, %c0_i32, %c0_i32_0 : i32, i32, i32
  }
  func.func @transform_3(%arg0: i32, %arg1: i32) -> (i32, i32, i32) {
    %c0_i32 = arith.constant 0 : i32
    %c0_i32_0 = arith.constant 0 : i32
    %c0_i32_1 = arith.constant 0 : i32
    return %arg1, %c0_i32, %c0_i32_0 : i32, i32, i32
  }
  func.func @transform_4(%arg0: i32, %arg1: i32) -> (i32, i32, i32) {
    %c0_i32 = arith.constant 0 : i32
    %c0_i32_0 = arith.constant 0 : i32
    %c0_i32_1 = arith.constant 0 : i32
    return %arg1, %c0_i32, %c0_i32_0 : i32, i32, i32
  }
  func.func @transform_5(%arg0: i32, %arg1: i32) -> (i32, i32, i32) {
    %c0_i32 = arith.constant 0 : i32
    %c0_i32_0 = arith.constant 0 : i32
    %c0_i32_1 = arith.constant 0 : i32
    return %arg1, %c0_i32, %c0_i32_0 : i32, i32, i32
  }
  func.func @transform_6(%arg0: i32, %arg1: i32) -> (i32, i32, i32) {
    %c0_i32 = arith.constant 0 : i32
    %c0_i32_0 = arith.constant 0 : i32
    %c0_i32_1 = arith.constant 0 : i32
    return %arg1, %c0_i32, %c0_i32_0 : i32, i32, i32
  }
  func.func @transform_7(%arg0: i32, %arg1: i32) -> (i32, i32, i32) {
    %c0_i32 = arith.constant 0 : i32
    %c0_i32_0 = arith.constant 0 : i32
    %c0_i32_1 = arith.constant 0 : i32
    return %arg1, %c0_i32, %c0_i32_0 : i32, i32, i32
  }
  func.func @transform_8(%arg0: i32, %arg1: i32) -> (i32, i32) {
    %c0_i32 = arith.constant 0 : i32
    %c0_i32_0 = arith.constant 0 : i32
    %c0_i32_1 = arith.constant 0 : i32
    return %c0_i32, %c0_i32_0 : i32, i32
  }
  func.func @transform_9(%arg0: i32, %arg1: i32) -> (i32, i32) {
    %c0_i32 = arith.constant 0 : i32
    %c0_i32_0 = arith.constant 0 : i32
    %c0_i32_1 = arith.constant 0 : i32
    return %c0_i32, %c0_i32_0 : i32, i32
  }
  func.func @transform_10(%arg0: i32, %arg1: i32) -> (i32, i32, i32) {
    %c0_i32 = arith.constant 0 : i32
    %c0_i32_0 = arith.constant 0 : i32
    %c0_i32_1 = arith.constant 0 : i32
    return %arg0, %c0_i32, %c0_i32_0 : i32, i32, i32
  }
}

</mosaic_0001>

<llo_original>
// kernel: tpu_custom_call.1
$region0: #{tpu_custom_call.1}
  #allocation0 [shape = 'u32[]', space=smem, size = 0x4, offset = 0x4, fixed_abs, tag = 'smem constant byte address 0x4 - core index']
  #allocation1 [shape = 'u32[144,128]{1,0:T(1,128)}', space=vmem, size = 0x12000, scoped, tag = 'internal scratch']
  #allocation2 [shape = 'f32[8,32]{1,0:T(8,128)}', space=vmem, size = 0x1000, scoped, tag = 'scratch operand']
  %s0 = inlined_call_operand.vmem [shape: f32[2,8,32], index: 0, kind: input, shape index: {}]
  %s1 = inlined_call_operand.vmem [shape: f32[8,32], index: 1, kind: input, shape index: {}]
  %s2 = inlined_call_operand.vmem [shape: bf16[2,96,32], index: 2, kind: input, shape index: {}]
  %s3 = inlined_call_operand.vmem [shape: bf16[2,32,32], index: 3, kind: input, shape index: {}]
  %s4 = inlined_call_operand.vmem [shape: bf16[2,64,32], index: 4, kind: input, shape index: {}]
  %s5 = inlined_call_operand.vmem [shape: bf16[2,32,64], index: 5, kind: input, shape index: {}]
  %s6 = inlined_call_operand.vmem [shape: f32[2,9,32], index: 6, kind: input, shape index: {}]
  %s7 = inlined_call_operand.vmem [shape: f32[2,1,64], index: 7, kind: input, shape index: {}]
  %s8 = inlined_call_operand.vmem [shape: bf16[50,32], index: 8, kind: input, shape index: {}]
  %s9 = inlined_call_operand.vmem [shape: f32[1,50], index: 9, kind: input, shape index: {}]
  %s10 = inlined_call_operand.hbm [shape: f32[2,8,50], index: 10, kind: output, shape index: {}]
  %s11 = sld [smem:[#allocation0]]
  $region81: #{tpu_custom_call.1} parent=0
    _
  %s13 = ssub.s32 1, %s11
  %s14 = scalar_select 0, %s13, %s11
  $region1: #{tpu_custom_call.1} parent=0
    #allocation3 [shape = 'u8[8192]{0}', space=vmem, size = 0x2000, scoped, tag = 'output window, operand 0']
    #allocation4 [shape = 's32[2]{0}', space=sflag, size = 0x8, scoped, tag = 'scoped memory for tpu_custom_call.1']
    %15 = vsyncpa [#allocation4], 0
    %s16 = scalar_lea.sflag [#allocation4], 1
    %17 = vsyncpa %s16, 0
    loop: start=0, step=1, limit=6
    $region2: #{tpu_custom_call.1} parent=1 // loop_pre_header
      _
    $region3: #{tpu_custom_call.1} parent=1 // loop_header
      %s19 = sphi 0, %s23
      %p20 = scmp.ge.s32.totalorder %s19, 6
      %s26 = sphi 0, %s38
      %s27 = sphi 0, %s34
      %s28 = sphi 0, %s26
      %s29 = sphi 0, %s27
      %s30 = sphi 0, %s28
      %s31 = sphi 0, %s29
      %s41 = sphi 0, %s43
      %s44 = sphi 0, %s41
      %s45 = sphi 0, %s44
      %s61 = sphi 0, %s45
      %s65 = sphi 0, %s65
      %s67 = sphi 0, %s65
      %s68 = sphi 0, %s67
      %s82 = sphi 0, %s68
      %s88 = sphi 0, %s90
      %s91 = sphi 0, %s88
      %s92 = sphi 0, %s91
      %s108 = sphi 0, %s92
      %s114 = sphi 0, %s116
      %s117 = sphi 0, %s114
      %s118 = sphi 0, %s117
      %s134 = sphi 0, %s118
      %s140 = sphi 0, %s142
      %s143 = sphi 0, %s140
      %s144 = sphi 0, %s143
      %s160 = sphi 0, %s144
      %s166 = sphi 0, %s168
      %s169 = sphi 0, %s166
      %s170 = sphi 0, %s169
      %s186 = sphi 0, %s170
      %s192 = sphi 0, %s194
      %s195 = sphi 0, %s192
      %s196 = sphi 0, %s195
      %s212 = sphi 0, %s196
      %s218 = sphi 0, %s220
      %s221 = sphi 0, %s218
      %s222 = sphi 0, %s221
      %s238 = sphi 0, %s222
      %s242 = sphi 0, %s242
      %s244 = sphi 0, %s242
      %s245 = sphi 0, %s244
      %s259 = sphi 0, %s245
      %s263 = sphi 0, %s263
      %s265 = sphi 0, %s263
      %s266 = sphi 0, %s265
      %s280 = sphi 0, %s266
      %s286 = sphi 0, %s288
      %s289 = sphi 0, %s286
      %s290 = sphi 0, %s289
      %s306 = sphi 0, %s290
    $region4: #{tpu_custom_call.1} parent=1 // loop_header_branch
      %22 = sbr.rel (%p20) target = $region8
    $region5: #{tpu_custom_call.1} parent=1 // loop_body
      %s24 = ssub.s32 %s19, 1
      %s25 = ssub.s32 %s19, 2
      %s32 = sadd.s32 1, %s27
      %p33 = scmp.ge.s32.totalorder %s32, 2
      %s34 = scalar_select %p33, 0, %s32
      %s35 = sadd.s32 1, %s26
      %s36 = scalar_select %p33, %s35, %s26
      %p37 = scmp.ge.s32.totalorder %s36, 2
      %s38 = scalar_select %p37, 0, %s36
      %s39 = ssub.s32 %s26, %s38
      %p40 = scmp.eq.s32.totalorder %s39, 0
      %s42 = sadd.s32 %s41, 1
      %s43 = scalar_select %p40, %s41, %s42
      %p46 = pneg %p40
      %p47 = scmp.eq.s32.totalorder %s19, 3
      %p48 = por %p46, %p47
      %p49 = scmp.ne.s32.totalorder %s41, %s44
      %p50 = scmp.eq.s32.totalorder %s19, 0
      %p51 = por %p49, %p50
      %p52 = scmp.ne.s32.totalorder %s41, %s44
      %p53 = scmp.eq.s32.totalorder %s24, 3
      %p54 = por %p52, %p53
      %p55 = scmp.ne.s32.totalorder %s44, %s45
      %p56 = scmp.eq.s32.totalorder %s24, 0
      %p57 = por %p55, %p56
      %p58 = scmp.ne.s32.totalorder %s44, %s45
      %p59 = scmp.eq.s32.totalorder %s25, 3
      %p60 = por %p58, %p59
      %p62 = scmp.ne.s32.totalorder %s45, %s61
      %p63 = scmp.eq.s32.totalorder %s25, 0
      %p64 = por %p62, %p63
      %s66 = sadd.s32 %s65, 1
      %p69 = scmp.eq.s32.totalorder %s19, 3
      %p70 = scmp.ne.s32.totalorder %s65, %s67
      %p71 = scmp.eq.s32.totalorder %s19, 0
      %p72 = por %p70, %p71
      %p73 = scmp.ne.s32.totalorder %s65, %s67
      %p74 = scmp.eq.s32.totalorder %s24, 3
      %p75 = por %p73, %p74
      %p76 = scmp.ne.s32.totalorder %s67, %s68
      %p77 = scmp.eq.s32.totalorder %s24, 0
      %p78 = por %p76, %p77
      %p79 = scmp.ne.s32.totalorder %s67, %s68
      %p80 = scmp.eq.s32.totalorder %s25, 3
      %p81 = por %p79, %p80
      %p83 = scmp.ne.s32.totalorder %s68, %s82
      %p84 = scmp.eq.s32.totalorder %s25, 0
      %p85 = por %p83, %p84
      %s86 = ssub.s32 %s27, %s34
      %p87 = scmp.eq.s32.totalorder %s86, 0
      %s89 = sadd.s32 %s88, 1
      %s90 = scalar_select %p87, %s88, %s89
      %p93 = pneg %p87
      %p94 = scmp.eq.s32.totalorder %s19, 3
      %p95 = por %p93, %p94
      %p96 = scmp.ne.s32.totalorder %s88, %s91
      %p97 = scmp.eq.s32.totalorder %s19, 0
      %p98 = por %p96, %p97
      %p99 = scmp.ne.s32.totalorder %s88, %s91
      %p100 = scmp.eq.s32.totalorder %s24, 3
      %p101 = por %p99, %p100
      %p102 = scmp.ne.s32.totalorder %s91, %s92
      %p103 = scmp.eq.s32.totalorder %s24, 0
      %p104 = por %p102, %p103
      %p105 = scmp.ne.s32.totalorder %s91, %s92
      %p106 = scmp.eq.s32.totalorder %s25, 3
      %p107 = por %p105, %p106
      %p109 = scmp.ne.s32.totalorder %s92, %s108
      %p110 = scmp.eq.s32.totalorder %s25, 0
      %p111 = por %p109, %p110
      %s112 = ssub.s32 %s27, %s34
      %p113 = scmp.eq.s32.totalorder %s112, 0
      %s115 = sadd.s32 %s114, 1
      %s116 = scalar_select %p113, %s114, %s115
      %p119 = pneg %p113
      %p120 = scmp.eq.s32.totalorder %s19, 3
      %p121 = por %p119, %p120
      %p122 = scmp.ne.s32.totalorder %s114, %s117
      %p123 = scmp.eq.s32.totalorder %s19, 0
      %p124 = por %p122, %p123
      %p125 = scmp.ne.s32.totalorder %s114, %s117
      %p126 = scmp.eq.s32.totalorder %s24, 3
      %p127 = por %p125, %p126
      %p128 = scmp.ne.s32.totalorder %s117, %s118
      %p129 = scmp.eq.s32.totalorder %s24, 0
      %p130 = por %p128, %p129
      %p131 = scmp.ne.s32.totalorder %s117, %s118
      %p132 = scmp.eq.s32.totalorder %s25, 3
      %p133 = por %p131, %p132
      %p135 = scmp.ne.s32.totalorder %s118, %s134
      %p136 = scmp.eq.s32.totalorder %s25, 0
      %p137 = por %p135, %p136
      %s138 = ssub.s32 %s27, %s34
      %p139 = scmp.eq.s32.totalorder %s138, 0
      %s141 = sadd.s32 %s140, 1
      %s142 = scalar_select %p139, %s140, %s141
      %p145 = pneg %p139
      %p146 = scmp.eq.s32.totalorder %s19, 3
      %p147 = por %p145, %p146
      %p148 = scmp.ne.s32.totalorder %s140, %s143
      %p149 = scmp.eq.s32.totalorder %s19, 0
      %p150 = por %p148, %p149
      %p151 = scmp.ne.s32.totalorder %s140, %s143
      %p152 = scmp.eq.s32.totalorder %s24, 3
      %p153 = por %p151, %p152
      %p154 = scmp.ne.s32.totalorder %s143, %s144
      %p155 = scmp.eq.s32.totalorder %s24, 0
      %p156 = por %p154, %p155
      %p157 = scmp.ne.s32.totalorder %s143, %s144
      %p158 = scmp.eq.s32.totalorder %s25, 3
      %p159 = por %p157, %p158
      %p161 = scmp.ne.s32.totalorder %s144, %s160
      %p162 = scmp.eq.s32.totalorder %s25, 0
      %p163 = por %p161, %p162
      %s164 = ssub.s32 %s27, %s34
      %p165 = scmp.eq.s32.totalorder %s164, 0
      %s167 = sadd.s32 %s166, 1
      %s168 = scalar_select %p165, %s166, %s167
      %p171 = pneg %p165
      %p172 = scmp.eq.s32.totalorder %s19, 3
      %p173 = por %p171, %p172
      %p174 = scmp.ne.s32.totalorder %s166, %s169
      %p175 = scmp.eq.s32.totalorder %s19, 0
      %p176 = por %p174, %p175
      %p177 = scmp.ne.s32.totalorder %s166, %s169
      %p178 = scmp.eq.s32.totalorder %s24, 3
      %p179 = por %p177, %p178
      %p180 = scmp.ne.s32.totalorder %s169, %s170
      %p181 = scmp.eq.s32.totalorder %s24, 0
      %p182 = por %p180, %p181
      %p183 = scmp.ne.s32.totalorder %s169, %s170
      %p184 = scmp.eq.s32.totalorder %s25, 3
      %p185 = por %p183, %p184
      %p187 = scmp.ne.s32.totalorder %s170, %s186
      %p188 = scmp.eq.s32.totalorder %s25, 0
      %p189 = por %p187, %p188
      %s190 = ssub.s32 %s27, %s34
      %p191 = scmp.eq.s32.totalorder %s190, 0
      %s193 = sadd.s32 %s192, 1
      %s194 = scalar_select %p191, %s192, %s193
      %p197 = pneg %p191
      %p198 = scmp.eq.s32.totalorder %s19, 3
      %p199 = por %p197, %p198
      %p200 = scmp.ne.s32.totalorder %s192, %s195
      %p201 = scmp.eq.s32.totalorder %s19, 0
      %p202 = por %p200, %p201
      %p203 = scmp.ne.s32.totalorder %s192, %s195
      %p204 = scmp.eq.s32.totalorder %s24, 3
      %p205 = por %p203, %p204
      %p206 = scmp.ne.s32.totalorder %s195, %s196
      %p207 = scmp.eq.s32.totalorder %s24, 0
      %p208 = por %p206, %p207
      %p209 = scmp.ne.s32.totalorder %s195, %s196
      %p210 = scmp.eq.s32.totalorder %s25, 3
      %p211 = por %p209, %p210
      %p213 = scmp.ne.s32.totalorder %s196, %s212
      %p214 = scmp.eq.s32.totalorder %s25, 0
      %p215 = por %p213, %p214
      %s216 = ssub.s32 %s27, %s34
      %p217 = scmp.eq.s32.totalorder %s216, 0
      %s219 = sadd.s32 %s218, 1
      %s220 = scalar_select %p217, %s218, %s219
      %p223 = pneg %p217
      %p224 = scmp.eq.s32.totalorder %s19, 3
      %p225 = por %p223, %p224
      %p226 = scmp.ne.s32.totalorder %s218, %s221
      %p227 = scmp.eq.s32.totalorder %s19, 0
      %p228 = por %p226, %p227
      %p229 = scmp.ne.s32.totalorder %s218, %s221
      %p230 = scmp.eq.s32.totalorder %s24, 3
      %p231 = por %p229, %p230
      %p232 = scmp.ne.s32.totalorder %s221, %s222
      %p233 = scmp.eq.s32.totalorder %s24, 0
      %p234 = por %p232, %p233
      %p235 = scmp.ne.s32.totalorder %s221, %s222
      %p236 = scmp.eq.s32.totalorder %s25, 3
      %p237 = por %p235, %p236
      %p239 = scmp.ne.s32.totalorder %s222, %s238
      %p240 = scmp.eq.s32.totalorder %s25, 0
      %p241 = por %p239, %p240
      %s243 = sadd.s32 %s242, 1
      %p246 = scmp.eq.s32.totalorder %s19, 3
      %p247 = scmp.ne.s32.totalorder %s242, %s244
      %p248 = scmp.eq.s32.totalorder %s19, 0
      %p249 = por %p247, %p248
      %p250 = scmp.ne.s32.totalorder %s242, %s244
      %p251 = scmp.eq.s32.totalorder %s24, 3
      %p252 = por %p250, %p251
      %p253 = scmp.ne.s32.totalorder %s244, %s245
      %p254 = scmp.eq.s32.totalorder %s24, 0
      %p255 = por %p253, %p254
      %p256 = scmp.ne.s32.totalorder %s244, %s245
      %p257 = scmp.eq.s32.totalorder %s25, 3
      %p258 = por %p256, %p257
      %p260 = scmp.ne.s32.totalorder %s245, %s259
      %p261 = scmp.eq.s32.totalorder %s25, 0
      %p262 = por %p260, %p261
      %s264 = sadd.s32 %s263, 1
      %p267 = scmp.eq.s32.totalorder %s19, 3
      %p268 = scmp.ne.s32.totalorder %s263, %s265
      %p269 = scmp.eq.s32.totalorder %s19, 0
      %p270 = por %p268, %p269
      %p271 = scmp.ne.s32.totalorder %s263, %s265
      %p272 = scmp.eq.s32.totalorder %s24, 3
      %p273 = por %p271, %p272
      %p274 = scmp.ne.s32.totalorder %s265, %s266
      %p275 = scmp.eq.s32.totalorder %s24, 0
      %p276 = por %p274, %p275
      %p277 = scmp.ne.s32.totalorder %s265, %s266
      %p278 = scmp.eq.s32.totalorder %s25, 3
      %p279 = por %p277, %p278
      %p281 = scmp.ne.s32.totalorder %s266, %s280
      %p282 = scmp.eq.s32.totalorder %s25, 0
      %p283 = por %p281, %p282
      %s284 = ssub.s32 %s26, %s38
      %p285 = scmp.eq.s32.totalorder %s284, 0
      %s287 = sadd.s32 %s286, 1
      %s288 = scalar_select %p285, %s286, %s287
      %p291 = pneg %p285
      %p292 = scmp.eq.s32.totalorder %s19, 3
      %p293 = por %p291, %p292
      %p294 = scmp.ne.s32.totalorder %s286, %s289
      %p295 = scmp.eq.s32.totalorder %s19, 0
      %p296 = por %p294, %p295
      %p297 = scmp.ne.s32.totalorder %s286, %s289
      %p298 = scmp.eq.s32.totalorder %s24, 3
      %p299 = por %p297, %p298
      %p300 = scmp.ne.s32.totalorder %s289, %s290
      %p301 = scmp.eq.s32.totalorder %s24, 0
      %p302 = por %p300, %p301
      %p303 = scmp.ne.s32.totalorder %s289, %s290
      %p304 = scmp.eq.s32.totalorder %s25, 3
      %p305 = por %p303, %p304
      %p307 = scmp.ne.s32.totalorder %s290, %s306
      %p308 = scmp.eq.s32.totalorder %s25, 0
      %p309 = por %p307, %p308
      %p310 = scmp.le.s32.totalorder 1, %s19
      %p311 = scmp.lt.s32.totalorder %s19, 5
      %p312 = pnand %p310, %p311
      %p313 = pneg %p312
      // Predicated region
      $region9: #{tpu_custom_call.1} parent=5 // pred_check
        _
      $region10: #{tpu_custom_call.1} parent=5 // pred_check_branch
        %315 = sbr.rel (%p312) target = $region12
      $region11: #{tpu_custom_call.1} parent=5 // pred_region
        %s316 = ssub.s32 %s19, 1
        // Predicated region
        $region13: #{tpu_custom_call.1} parent=11 // pred_check
          %p317 = pneg %p78
        $region14: #{tpu_custom_call.1} parent=11 // pred_check_branch
          %319 = sbr.rel (%p317) target = $region16
        $region15: #{tpu_custom_call.1} parent=11 // pred_region
          _
        $region16: #{tpu_custom_call.1} parent=11 // pred_fallthru
          _
        // Predicated region
        $region17: #{tpu_custom_call.1} parent=11 // pred_check
          %p320 = pneg %p255
        $region18: #{tpu_custom_call.1} parent=11 // pred_check_branch
          %322 = sbr.rel (%p320) target = $region20
        $region19: #{tpu_custom_call.1} parent=11 // pred_region
          _
        $region20: #{tpu_custom_call.1} parent=11 // pred_fallthru
          _
        // Predicated region
        $region21: #{tpu_custom_call.1} parent=11 // pred_check
          %p323 = pneg %p276
        $region22: #{tpu_custom_call.1} parent=11 // pred_check_branch
          %325 = sbr.rel (%p323) target = $region24
        $region23: #{tpu_custom_call.1} parent=11 // pred_region
          _
        $region24: #{tpu_custom_call.1} parent=11 // pred_fallthru
          _
      $region12: #{tpu_custom_call.1} parent=5 // pred_fallthru
        _
      %p326 = scmp.lt.s32.totalorder %s19, 4
      // Predicated region
      $region25: #{tpu_custom_call.1} parent=5 // pred_check
        %p327 = pneg %p326
      $region26: #{tpu_custom_call.1} parent=5 // pred_check_branch
        %329 = sbr.rel (%p327) target = $region28
      $region27: #{tpu_custom_call.1} parent=5 // pred_region
        // Predicated region
        $region29: #{tpu_custom_call.1} parent=27 // pred_check
          %p330 = pneg %p51
        $region30: #{tpu_custom_call.1} parent=27 // pred_check_branch
          %332 = sbr.rel (%p330) target = $region32
        $region31: #{tpu_custom_call.1} parent=27 // pred_region
          %p333 = scmp.lt.s32.totalorder %s26, 1
          %s334 = scalar_select %p333, %s26, 1
          %s335 = smul.addr %s334, 8
          %s336 = scalar_lea.vmem %s0, %s335
        $region32: #{tpu_custom_call.1} parent=27 // pred_fallthru
          _
        // Predicated region
        $region33: #{tpu_custom_call.1} parent=27 // pred_check
          %p337 = pneg %p98
        $region34: #{tpu_custom_call.1} parent=27 // pred_check_branch
          %339 = sbr.rel (%p337) target = $region36
        $region35: #{tpu_custom_call.1} parent=27 // pred_region
          %p340 = scmp.lt.s32.totalorder %s27, 1
          %s341 = scalar_select %p340, %s27, 1
          %s342 = smul.addr %s341, 12
          %s343 = smul.addr %s342, 4
          %s344 = scalar_lea.vmem %s2, %s343
        $region36: #{tpu_custom_call.1} parent=27 // pred_fallthru
          _
        // Predicated region
        $region37: #{tpu_custom_call.1} parent=27 // pred_check
          %p345 = pneg %p124
        $region38: #{tpu_custom_call.1} parent=27 // pred_check_branch
          %347 = sbr.rel (%p345) target = $region40
        $region39: #{tpu_custom_call.1} parent=27 // pred_region
          %p348 = scmp.lt.s32.totalorder %s27, 1
          %s349 = scalar_select %p348, %s27, 1
          %s350 = smul.addr %s349, 4
          %s351 = smul.addr %s350, 4
          %s352 = scalar_lea.vmem %s3, %s351
        $region40: #{tpu_custom_call.1} parent=27 // pred_fallthru
          _
        // Predicated region
        $region41: #{tpu_custom_call.1} parent=27 // pred_check
          %p353 = pneg %p150
        $region42: #{tpu_custom_call.1} parent=27 // pred_check_branch
          %355 = sbr.rel (%p353) target = $region44
        $region43: #{tpu_custom_call.1} parent=27 // pred_region
          %p356 = scmp.lt.s32.totalorder %s27, 1
          %s357 = scalar_select %p356, %s27, 1
          %s358 = smul.addr %s357, 8
          %s359 = smul.addr %s358, 4
          %s360 = scalar_lea.vmem %s4, %s359
        $region44: #{tpu_custom_call.1} parent=27 // pred_fallthru
          _
        // Predicated region
        $region45: #{tpu_custom_call.1} parent=27 // pred_check
          %p361 = pneg %p176
        $region46: #{tpu_custom_call.1} parent=27 // pred_check_branch
          %363 = sbr.rel (%p361) target = $region48
        $region47: #{tpu_custom_call.1} parent=27 // pred_region
          %p364 = scmp.lt.s32.totalorder %s27, 1
          %s365 = scalar_select %p364, %s27, 1
          %s366 = smul.addr %s365, 4
          %s367 = smul.addr %s366, 4
          %s368 = scalar_lea.vmem %s5, %s367
        $region48: #{tpu_custom_call.1} parent=27 // pred_fallthru
          _
        // Predicated region
        $region49: #{tpu_custom_call.1} parent=27 // pred_check
          %p369 = pneg %p202
        $region50: #{tpu_custom_call.1} parent=27 // pred_check_branch
          %371 = sbr.rel (%p369) target = $region52
        $region51: #{tpu_custom_call.1} parent=27 // pred_region
          %p372 = scmp.lt.s32.totalorder %s27, 1
          %s373 = scalar_select %p372, %s27, 1
          %s374 = smul.addr %s373, 2
          %s375 = smul.addr %s374, 8
          %s376 = scalar_lea.vmem %s6, %s375
        $region52: #{tpu_custom_call.1} parent=27 // pred_fallthru
          _
        // Predicated region
        $region53: #{tpu_custom_call.1} parent=27 // pred_check
          %p377 = pneg %p228
        $region54: #{tpu_custom_call.1} parent=27 // pred_check_branch
          %379 = sbr.rel (%p377) target = $region56
        $region55: #{tpu_custom_call.1} parent=27 // pred_region
          %p380 = scmp.lt.s32.totalorder %s27, 1
          %s381 = scalar_select %p380, %s27, 1
          %s382 = scalar_lea.vmem %s7, %s381
        $region56: #{tpu_custom_call.1} parent=27 // pred_fallthru
          _
      $region28: #{tpu_custom_call.1} parent=5 // pred_fallthru
        _
      %p383 = scmp.le.s32.totalorder 1, %s19
      %p384 = scmp.lt.s32.totalorder %s19, 5
      %p385 = pnand %p383, %p384
      %p386 = pneg %p385
      // Predicated region
      $region57: #{tpu_custom_call.1} parent=5 // pred_check
        _
      $region58: #{tpu_custom_call.1} parent=5 // pred_check_branch
        %388 = sbr.rel (%p385) target = $region60
      $region59: #{tpu_custom_call.1} parent=5 // pred_region
        %s389 = ssub.s32 %s19, 1
        %p390 = scmp.lt.s32.totalorder %s28, 1
        %s391 = scalar_select %p390, %s28, 1
        %s392 = smul.addr %s391, 8
        %s393 = scalar_lea.vmem %s0, %s392
        %p394 = pneg %p57
        %p395 = pneg %p54
        %p396 = pneg %p78
        %p397 = pneg %p75
        %p398 = scmp.lt.s32.totalorder %s29, 1
        %s399 = scalar_select %p398, %s29, 1
        %s400 = smul.addr %s399, 12
        %s401 = smul.addr %s400, 4
        %s402 = scalar_lea.vmem %s2, %s401
        %p403 = pneg %p104
        %p404 = pneg %p101
        %p405 = scmp.lt.s32.totalorder %s29, 1
        %s406 = scalar_select %p405, %s29, 1
        %s407 = smul.addr %s406, 4
        %s408 = smul.addr %s407, 4
        %s409 = scalar_lea.vmem %s3, %s408
        %p410 = pneg %p130
        %p411 = pneg %p127
        %p412 = scmp.lt.s32.totalorder %s29, 1
        %s413 = scalar_select %p412, %s29, 1
        %s414 = smul.addr %s413, 8
        %s415 = smul.addr %s414, 4
        %s416 = scalar_lea.vmem %s4, %s415
        %p417 = pneg %p156
        %p418 = pneg %p153
        %p419 = scmp.lt.s32.totalorder %s29, 1
        %s420 = scalar_select %p419, %s29, 1
        %s421 = smul.addr %s420, 4
        %s422 = smul.addr %s421, 4
        %s423 = scalar_lea.vmem %s5, %s422
        %p424 = pneg %p182
        %p425 = pneg %p179
        %p426 = scmp.lt.s32.totalorder %s29, 1
        %s427 = scalar_select %p426, %s29, 1
        %s428 = smul.addr %s427, 2
        %s429 = smul.addr %s428, 8
        %s430 = scalar_lea.vmem %s6, %s429
        %p431 = pneg %p208
        %p432 = pneg %p205
        %p433 = scmp.lt.s32.totalorder %s29, 1
        %s434 = scalar_select %p433, %s29, 1
        %s435 = scalar_lea.vmem %s7, %s434
        %p436 = pneg %p234
        %p437 = pneg %p231
        %p438 = pneg %p255
        %p439 = pneg %p252
        %p440 = pneg %p276
        %p441 = pneg %p273
        %p442 = pneg %p302
        %p443 = pneg %p299
        %s444 = sand.u32 %s289, 1
        %s445 = scalar_lea.sflag [#allocation4], %s444
        %s446 = sand.u32 %s289, 1
        %s447 = smul.addr %s446, 8
        %s448 = scalar_lea.vmem [#allocation3], %s447
        %p449 = scmp.lt.s32.totalorder %s28, 1
        %s450 = scalar_select %p449, %s28, 1
        %s451 = smul.addr %s450, 8
        %s452 = scalar_lea.vmem %s0, %s451
        %p453 = scmp.lt.s32.totalorder %s29, 1
        %s454 = scalar_select %p453, %s29, 1
        %s455 = smul.addr %s454, 12
        %s456 = smul.addr %s455, 4
        %s457 = scalar_lea.vmem %s2, %s456
        %p458 = scmp.lt.s32.totalorder %s29, 1
        %s459 = scalar_select %p458, %s29, 1
        %s460 = smul.addr %s459, 4
        %s461 = smul.addr %s460, 4
        %s462 = scalar_lea.vmem %s3, %s461
        %p463 = scmp.lt.s32.totalorder %s29, 1
        %s464 = scalar_select %p463, %s29, 1
        %s465 = smul.addr %s464, 8
        %s466 = smul.addr %s465, 4
        %s467 = scalar_lea.vmem %s4, %s466
        %p468 = scmp.lt.s32.totalorder %s29, 1
        %s469 = scalar_select %p468, %s29, 1
        %s470 = smul.addr %s469, 4
        %s471 = smul.addr %s470, 4
        %s472 = scalar_lea.vmem %s5, %s471
        %p473 = scmp.lt.s32.totalorder %s29, 1
        %s474 = scalar_select %p473, %s29, 1
        %s475 = smul.addr %s474, 2
        %s476 = smul.addr %s475, 8
        %s477 = scalar_lea.vmem %s6, %s476
        %p478 = scmp.lt.s32.totalorder %s29, 1
        %s479 = scalar_select %p478, %s29, 1
        %s480 = scalar_lea.vmem %s7, %s479
        %p482 = scmp.eq.s32.totalorder %s29, 0
        // Predicated region
        $region61: #{tpu_custom_call.1} parent=59 // pred_check
          %p483 = pneg %p482
        $region62: #{tpu_custom_call.1} parent=59 // pred_check_branch
          %485 = sbr.rel (%p483) target = $region64
        $region63: #{tpu_custom_call.1} parent=59 // pred_region
          %v486 = vld [vmem:[%s452] sm:$0xff]
          %v487 = vmul.f32 %v486, 5.656854
          %v488 = vld [vmem:[%s1] sm:$0xff]
          %v489 = vadd.f32 %v487, %v488
          %vm490 = vcmask 261120
          %491 = vst.msk [vmem:[#allocation2] sm:$0xff] %vm490, %v489
        $region64: #{tpu_custom_call.1} parent=59 // pred_fallthru
          _
        %v492 = vld [vmem:[#allocation2] sm:$0xff]
        %v493 = vld [vmem:[%s477] sm:$0xff]
        %v494 = vld [vmem:[%s477 + $0x8] sm:$0x1]
        %v495 = vld [vmem:[%s480] sm:$0x1]
        %v496 = vld [vmem:[%s457] sm:$0xf]
        %v497 = vld [vmem:[%s457 + $0x4] sm:$0xf]
        %v498 = vld [vmem:[%s457 + $0x8] sm:$0xf]
        %v499 = vld [vmem:[%s457 + $0xc] sm:$0xf]
        %v500 = vld [vmem:[%s457 + $0x10] sm:$0xf]
        %v501 = vld [vmem:[%s457 + $0x14] sm:$0xf]
        %v502 = vld [vmem:[%s457 + $0x18] sm:$0xf]
        %v503 = vld [vmem:[%s457 + $0x1c] sm:$0xf]
        %v504 = vld [vmem:[%s457 + $0x20] sm:$0xf]
        %v505 = vld [vmem:[%s457 + $0x24] sm:$0xf]
        %v506 = vld [vmem:[%s457 + $0x28] sm:$0xf]
        %v507 = vld [vmem:[%s457 + $0x2c] sm:$0xf]
        %v508 = vpack.c.bf16 %v492, %v492
        %v509 = vlaneseq
        %v510 = vshrl.u32 %v509, 7
        %v511 = vsub.s32 0, %v510
        %v512 = vrot.slane %v493, %v511
        %v517 = vunpack.c.l.b16 %v496
        %v518 = vunpack.c.l.b16 %v497
        %v519 = vunpack.c.l.b16 %v498
        %v520 = vunpack.c.l.b16 %v499
        %v521 = vpack.c.b16 %v518, %v517
        %v522 = vpack.c.b16 %v520, %v519
        %vm523 = vcmask 261120
        %v525 = vsel %vm523, %v508, 0
        %v528 = vsel %vm523, %v521, 0
        %v531 = vsel %vm523, %v522, 0
        %533 = vmatprep.subr.bf16.mxu0 0
        %534 = vmatpush1.bf16.xpose.msra.mxu0 0
        %535 = vmatprep.subr.bf16.mxu0 0
        %536 = vmatpush1.bf16.xpose.msra.mxu0 0
        %537 = vmatprep.subr.bf16.mxu0 0
        %538 = vmatpush1.bf16.xpose.msra.mxu0 0
        %539 = vmatprep.subr.bf16.mxu0 0
        %540 = vmatpush1.bf16.xpose.msra.mxu0 0
        %541 = vmatprep.subr.bf16.mxu0 0
        %542 = vmatpush1.bf16.xpose.msra.mxu0 0
        %543 = vmatprep.subr.bf16.mxu0 0
        %544 = vmatpush1.bf16.xpose.msra.mxu0 0
        %545 = vmatprep.subr.bf16.mxu0 0
        %546 = vmatpush1.bf16.xpose.msra.mxu0 %v531
        %547 = vmatprep.subr.bf16.mxu0 0
        %548 = vmatpush1.bf16.xpose.msra.mxu0 %v528
        %549 = vmatprep.subr.bf16.mxu0 0
        %550 = vmatpush2.bf16.xpose.msra.mxu0 0
        %551 = vmatprep.subr.bf16.mxu0 0
        %552 = vmatpush2.bf16.xpose.msra.mxu0 0
        %553 = vmatprep.subr.bf16.mxu0 0
        %554 = vmatpush2.bf16.xpose.msra.mxu0 0
        %555 = vmatprep.subr.bf16.mxu0 0
        %556 = vmatpush2.bf16.xpose.msra.mxu0 0
        %557 = vmatprep.subr.bf16.mxu0 0
        %558 = vmatpush2.bf16.xpose.msra.mxu0 0
        %559 = vmatprep.subr.bf16.mxu0 0
        %560 = vmatpush2.bf16.xpose.msra.mxu0 0
        %561 = vmatprep.subr.bf16.mxu0 0
        %562 = vmatpush2.bf16.xpose.msra.mxu0 0
        %563 = vmatprep.subr.bf16.mxu0 0
        %564 = vmatpush2.bf16.xpose.msra.mxu0 0
        %565 = vmatprep.mubr.bf16.mxu0 0
        %566 = vmatmul.mubr.bf16.gmra.mxu0 %v525
        %v567 = vpop.f32.mrf.mxu0
        %v568 = vadd.f32 %v512, %v567
        %v569 = vpop.f32.mrf.mxu0
        %v570 = vpop.f32.mrf.mxu0
        %v571 = vpop.f32.mrf.mxu0
        %572 = vdwg.mxu0
        %v573 = vlaneseq
        %v574 = vshrl.u32 %v573, 7
        %v575 = vsub.s32 1, %v574
        %v576 = vrot.slane %v493, %v575
        %v581 = vunpack.c.l.b16 %v500
        %v582 = vunpack.c.l.b16 %v501
        %v583 = vunpack.c.l.b16 %v502
        %v584 = vunpack.c.l.b16 %v503
        %v585 = vpack.c.b16 %v582, %v581
        %v586 = vpack.c.b16 %v584, %v583
        %v588 = vsel %vm523, %v585, 0
        %v591 = vsel %vm523, %v586, 0
        %593 = vmatprep.subr.bf16.mxu0 0
        %594 = vmatpush1.bf16.xpose.msra.mxu0 0
        %595 = vmatprep.subr.bf16.mxu0 0
        %596 = vmatpush1.bf16.xpose.msra.mxu0 0
        %597 = vmatprep.subr.bf16.mxu0 0
        %598 = vmatpush1.bf16.xpose.msra.mxu0 0
        %599 = vmatprep.subr.bf16.mxu0 0
        %600 = vmatpush1.bf16.xpose.msra.mxu0 0
        %601 = vmatprep.subr.bf16.mxu0 0
        %602 = vmatpush1.bf16.xpose.msra.mxu0 0
        %603 = vmatprep.subr.bf16.mxu0 0
        %604 = vmatpush1.bf16.xpose.msra.mxu0 0
        %605 = vmatprep.subr.bf16.mxu0 0
        %606 = vmatpush1.bf16.xpose.msra.mxu0 %v591
        %607 = vmatprep.subr.bf16.mxu0 0
        %608 = vmatpush1.bf16.xpose.msra.mxu0 %v588
        %609 = vmatprep.subr.bf16.mxu0 0
        %610 = vmatpush2.bf16.xpose.msra.mxu0 0
        %611 = vmatprep.subr.bf16.mxu0 0
        %612 = vmatpush2.bf16.xpose.msra.mxu0 0
        %613 = vmatprep.subr.bf16.mxu0 0
        %614 = vmatpush2.bf16.xpose.msra.mxu0 0
        %615 = vmatprep.subr.bf16.mxu0 0
        %616 = vmatpush2.bf16.xpose.msra.mxu0 0
        %617 = vmatprep.subr.bf16.mxu0 0
        %618 = vmatpush2.bf16.xpose.msra.mxu0 0
        %619 = vmatprep.subr.bf16.mxu0 0
        %620 = vmatpush2.bf16.xpose.msra.mxu0 0
        %621 = vmatprep.subr.bf16.mxu0 0
        %622 = vmatpush2.bf16.xpose.msra.mxu0 0
        %623 = vmatprep.subr.bf16.mxu0 0
        %624 = vmatpush2.bf16.xpose.msra.mxu0 0
        %625 = vmatprep.mubr.bf16.mxu0 0
        %626 = vmatmul.mubr.bf16.gmra.mxu0 %v525
        %v627 = vpop.f32.mrf.mxu0
        %v628 = vadd.f32 %v576, %v627
        %v629 = vpop.f32.mrf.mxu0
        %v630 = vpop.f32.mrf.mxu0
        %v631 = vpop.f32.mrf.mxu0
        %632 = vdwg.mxu0
        %v633 = vlaneseq
        %v634 = vshrl.u32 %v633, 7
        %v635 = vsub.s32 2, %v634
        %v636 = vrot.slane %v493, %v635
        %v641 = vunpack.c.l.b16 %v504
        %v642 = vunpack.c.l.b16 %v505
        %v643 = vunpack.c.l.b16 %v506
        %v644 = vunpack.c.l.b16 %v507
        %v645 = vpack.c.b16 %v642, %v641
        %v646 = vpack.c.b16 %v644, %v643
        %v648 = vsel %vm523, %v645, 0
        %v651 = vsel %vm523, %v646, 0
        %653 = vmatprep.subr.bf16.mxu0 0
        %654 = vmatpush1.bf16.xpose.msra.mxu0 0
        %655 = vmatprep.subr.bf16.mxu0 0
        %656 = vmatpush1.bf16.xpose.msra.mxu0 0
        %657 = vmatprep.subr.bf16.mxu0 0
        %658 = vmatpush1.bf16.xpose.msra.mxu0 0
        %659 = vmatprep.subr.bf16.mxu0 0
        %660 = vmatpush1.bf16.xpose.msra.mxu0 0
        %661 = vmatprep.subr.bf16.mxu0 0
        %662 = vmatpush1.bf16.xpose.msra.mxu0 0
        %663 = vmatprep.subr.bf16.mxu0 0
        %664 = vmatpush1.bf16.xpose.msra.mxu0 0
        %665 = vmatprep.subr.bf16.mxu0 0
        %666 = vmatpush1.bf16.xpose.msra.mxu0 %v651
        %667 = vmatprep.subr.bf16.mxu0 0
        %668 = vmatpush1.bf16.xpose.msra.mxu0 %v648
        %669 = vmatprep.subr.bf16.mxu0 0
        %670 = vmatpush2.bf16.xpose.msra.mxu0 0
        %671 = vmatprep.subr.bf16.mxu0 0
        %672 = vmatpush2.bf16.xpose.msra.mxu0 0
        %673 = vmatprep.subr.bf16.mxu0 0
        %674 = vmatpush2.bf16.xpose.msra.mxu0 0
        %675 = vmatprep.subr.bf16.mxu0 0
        %676 = vmatpush2.bf16.xpose.msra.mxu0 0
        %677 = vmatprep.subr.bf16.mxu0 0
        %678 = vmatpush2.bf16.xpose.msra.mxu0 0
        %679 = vmatprep.subr.bf16.mxu0 0
        %680 = vmatpush2.bf16.xpose.msra.mxu0 0
        %681 = vmatprep.subr.bf16.mxu0 0
        %682 = vmatpush2.bf16.xpose.msra.mxu0 0
        %683 = vmatprep.subr.bf16.mxu0 0
        %684 = vmatpush2.bf16.xpose.msra.mxu0 0
        %685 = vmatprep.mubr.bf16.mxu0 0
        %686 = vmatmul.mubr.bf16.gmra.mxu0 %v525
        %v687 = vpop.f32.mrf.mxu0
        %v688 = vadd.f32 %v636, %v687
        %v689 = vpop.f32.mrf.mxu0
        %v690 = vpop.f32.mrf.mxu0
        %v691 = vpop.f32.mrf.mxu0
        %692 = vdwg.mxu0
        %694 = vrot.lane.b32.xlu0 %v568, 112
        %v695 = vpop.permute.xlu0 %694
        %v697 = vcombine.high %v568, 0.0
        %v699 = vunpack.c.l.s4 1983009808
        %v700 = vunpack.c.0.s8 %v699
        %v701 = vlaneseq
        %v702 = vshrl.u32 %v701, 7
        %v703 = vsub.s32 %v700, %v702
        %v704 = vrot.slane %v568, %v703
        %v706 = vunpack.c.l.s4 1983009808
        %v707 = vunpack.c.0.s8 %v706
        %v708 = vlaneseq
        %v709 = vshrl.u32 %v708, 7
        %v710 = vsub.s32 %v707, %v709
        %v711 = vrot.slane %v697, %v710
        %v712 = vcombine.high %v695, 0.0
        %v714 = vunpack.c.l.s4 1983009808
        %v715 = vunpack.c.0.s8 %v714
        %v716 = vlaneseq
        %v717 = vshrl.u32 %v716, 7
        %v718 = vsub.s32 %v715, %v717
        %v719 = vrot.slane %v695, %v718
        %v721 = vunpack.c.l.s4 1983009808
        %v722 = vunpack.c.0.s8 %v721
        %v723 = vlaneseq
        %v724 = vshrl.u32 %v723, 7
        %v725 = vsub.s32 %v722, %v724
        %v726 = vrot.slane %v712, %v725
        %v727 = vcombine.low %v704, %v719
        %v728 = vcombine.high %v704, %v719
        %v730 = vunpack.c.l.s4 1934713408
        %v731 = vunpack.c.0.s8 %v730
        %v732 = vlaneseq
        %v733 = vshrl.u32 %v732, 7
        %v734 = vsub.s32 %v731, %v733
        %v735 = vrot.slane %v727, %v734
        %v737 = vunpack.c.l.s4 1934713408
        %v738 = vunpack.c.0.s8 %v737
        %v739 = vlaneseq
        %v740 = vshrl.u32 %v739, 7
        %v741 = vsub.s32 %v738, %v740
        %v742 = vrot.slane %v728, %v741
        %v743 = vcombine.low %v711, %v726
        %v744 = vcombine.high %v711, %v726
        %v746 = vunpack.c.l.s4 1934713408
        %v747 = vunpack.c.0.s8 %v746
        %v748 = vlaneseq
        %v749 = vshrl.u32 %v748, 7
        %v750 = vsub.s32 %v747, %v749
        %v751 = vrot.slane %v743, %v750
        %v753 = vunpack.c.l.s4 1934713408
        %v754 = vunpack.c.0.s8 %v753
        %v755 = vlaneseq
        %v756 = vshrl.u32 %v755, 7
        %v757 = vsub.s32 %v754, %v756
        %v758 = vrot.slane %v744, %v757
        %v759 = vcombine.high %v735, 0.0
        %v760 = vcombine.high %v742, 0.0
        %v761 = vcombine.high %v751, 0.0
        %v762 = vcombine.high %v758, 0.0
        %v763 = vcombine.low %v735, %v742
        %v765 = vunpack.c.l.s4 1983009808
        %v766 = vunpack.c.0.s8 %v765
        %v767 = vlaneseq
        %v768 = vshrl.u32 %v767, 7
        %v769 = vsub.s32 %v766, %v768
        %v770 = vrot.slane %v763, %v769
        %v771 = vcombine.low %v759, %v760
        %v773 = vunpack.c.l.s4 1983009808
        %v774 = vunpack.c.0.s8 %v773
        %v775 = vlaneseq
        %v776 = vshrl.u32 %v775, 7
        %v777 = vsub.s32 %v774, %v776
        %v778 = vrot.slane %v771, %v777
        %v779 = vcombine.low %v751, %v758
        %v781 = vunpack.c.l.s4 1983009808
        %v782 = vunpack.c.0.s8 %v781
        %v783 = vlaneseq
        %v784 = vshrl.u32 %v783, 7
        %v785 = vsub.s32 %v782, %v784
        %v786 = vrot.slane %v779, %v785
        %v787 = vcombine.low %v761, %v762
        %v789 = vunpack.c.l.s4 1983009808
        %v790 = vunpack.c.0.s8 %v789
        %v791 = vlaneseq
        %v792 = vshrl.u32 %v791, 7
        %v793 = vsub.s32 %v790, %v792
        %v794 = vrot.slane %v787, %v793
        %v795 = vcombine.low %v770, %v778
        %v797 = vunpack.c.l.s4 1934713408
        %v798 = vunpack.c.0.s8 %v797
        %v799 = vlaneseq
        %v800 = vshrl.u32 %v799, 7
        %v801 = vsub.s32 %v798, %v800
        %v802 = vrot.slane %v795, %v801
        %v803 = vcombine.low %v786, %v794
        %v805 = vunpack.c.l.s4 1934713408
        %v806 = vunpack.c.0.s8 %v805
        %v807 = vlaneseq
        %v808 = vshrl.u32 %v807, 7
        %v809 = vsub.s32 %v806, %v808
        %v810 = vrot.slane %v803, %v809
        %v811 = vcombine.low %v802, %v810
        %v812 = vcombine.high %v802, %v810
        %v813 = vmul.f32 %v811, 0.25
        %v814 = vmul.f32 %v812, 0.25
        %v815 = vpack.c.bf16 %v813, %v813
        %v816 = vpack.c.bf16 %v814, %v814
        %818 = vrot.lane.b32.xlu0 %v628, 112
        %v819 = vpop.permute.xlu0 %818
        %v821 = vcombine.high %v628, 0.0
        %v823 = vunpack.c.l.s4 1983009808
        %v824 = vunpack.c.0.s8 %v823
        %v825 = vlaneseq
        %v826 = vshrl.u32 %v825, 7
        %v827 = vsub.s32 %v824, %v826
        %v828 = vrot.slane %v628, %v827
        %v830 = vunpack.c.l.s4 1983009808
        %v831 = vunpack.c.0.s8 %v830
        %v832 = vlaneseq
        %v833 = vshrl.u32 %v832, 7
        %v834 = vsub.s32 %v831, %v833
        %v835 = vrot.slane %v821, %v834
        %v836 = vcombine.high %v819, 0.0
        %v838 = vunpack.c.l.s4 1983009808
        %v839 = vunpack.c.0.s8 %v838
        %v840 = vlaneseq
        %v841 = vshrl.u32 %v840, 7
        %v842 = vsub.s32 %v839, %v841
        %v843 = vrot.slane %v819, %v842
        %v845 = vunpack.c.l.s4 1983009808
        %v846 = vunpack.c.0.s8 %v845
        %v847 = vlaneseq
        %v848 = vshrl.u32 %v847, 7
        %v849 = vsub.s32 %v846, %v848
        %v850 = vrot.slane %v836, %v849
        %v851 = vcombine.low %v828, %v843
        %v852 = vcombine.high %v828, %v843
        %v854 = vunpack.c.l.s4 1934713408
        %v855 = vunpack.c.0.s8 %v854
        %v856 = vlaneseq
        %v857 = vshrl.u32 %v856, 7
        %v858 = vsub.s32 %v855, %v857
        %v859 = vrot.slane %v851, %v858
        %v861 = vunpack.c.l.s4 1934713408
        %v862 = vunpack.c.0.s8 %v861
        %v863 = vlaneseq
        %v864 = vshrl.u32 %v863, 7
        %v865 = vsub.s32 %v862, %v864
        %v866 = vrot.slane %v852, %v865
        %v867 = vcombine.low %v835, %v850
        %v868 = vcombine.high %v835, %v850
        %v870 = vunpack.c.l.s4 1934713408
        %v871 = vunpack.c.0.s8 %v870
        %v872 = vlaneseq
        %v873 = vshrl.u32 %v872, 7
        %v874 = vsub.s32 %v871, %v873
        %v875 = vrot.slane %v867, %v874
        %v877 = vunpack.c.l.s4 1934713408
        %v878 = vunpack.c.0.s8 %v877
        %v879 = vlaneseq
        %v880 = vshrl.u32 %v879, 7
        %v881 = vsub.s32 %v878, %v880
        %v882 = vrot.slane %v868, %v881
        %v883 = vcombine.high %v859, 0.0
        %v884 = vcombine.high %v866, 0.0
        %v885 = vcombine.high %v875, 0.0
        %v886 = vcombine.high %v882, 0.0
        %v887 = vcombine.low %v859, %v866
        %v889 = vunpack.c.l.s4 1983009808
        %v890 = vunpack.c.0.s8 %v889
        %v891 = vlaneseq
        %v892 = vshrl.u32 %v891, 7
        %v893 = vsub.s32 %v890, %v892
        %v894 = vrot.slane %v887, %v893
        %v895 = vcombine.low %v883, %v884
        %v897 = vunpack.c.l.s4 1983009808
        %v898 = vunpack.c.0.s8 %v897
        %v899 = vlaneseq
        %v900 = vshrl.u32 %v899, 7
        %v901 = vsub.s32 %v898, %v900
        %v902 = vrot.slane %v895, %v901
        %v903 = vcombine.low %v875, %v882
        %v905 = vunpack.c.l.s4 1983009808
        %v906 = vunpack.c.0.s8 %v905
        %v907 = vlaneseq
        %v908 = vshrl.u32 %v907, 7
        %v909 = vsub.s32 %v906, %v908
        %v910 = vrot.slane %v903, %v909
        %v911 = vcombine.low %v885, %v886
        %v913 = vunpack.c.l.s4 1983009808
        %v914 = vunpack.c.0.s8 %v913
        %v915 = vlaneseq
        %v916 = vshrl.u32 %v915, 7
        %v917 = vsub.s32 %v914, %v916
        %v918 = vrot.slane %v911, %v917
        %v919 = vcombine.low %v894, %v902
        %v921 = vunpack.c.l.s4 1934713408
        %v922 = vunpack.c.0.s8 %v921
        %v923 = vlaneseq
        %v924 = vshrl.u32 %v923, 7
        %v925 = vsub.s32 %v922, %v924
        %v926 = vrot.slane %v919, %v925
        %v927 = vcombine.low %v910, %v918
        %v929 = vunpack.c.l.s4 1934713408
        %v930 = vunpack.c.0.s8 %v929
        %v931 = vlaneseq
        %v932 = vshrl.u32 %v931, 7
        %v933 = vsub.s32 %v930, %v932
        %v934 = vrot.slane %v927, %v933
        %v935 = vcombine.low %v926, %v934
        %v936 = vcombine.high %v926, %v934
        %v937 = vpack.c.bf16 %v935, %v935
        %v938 = vpack.c.bf16 %v936, %v936
        %940 = vrot.lane.b32.xlu0 %v688, 112
        %v941 = vpop.permute.xlu0 %940
        %v943 = vcombine.high %v688, 0.0
        %v945 = vunpack.c.l.s4 1983009808
        %v946 = vunpack.c.0.s8 %v945
        %v947 = vlaneseq
        %v948 = vshrl.u32 %v947, 7
        %v949 = vsub.s32 %v946, %v948
        %v950 = vrot.slane %v688, %v949
        %v952 = vunpack.c.l.s4 1983009808
        %v953 = vunpack.c.0.s8 %v952
        %v954 = vlaneseq
        %v955 = vshrl.u32 %v954, 7
        %v956 = vsub.s32 %v953, %v955
        %v957 = vrot.slane %v943, %v956
        %v958 = vcombine.high %v941, 0.0
        %v960 = vunpack.c.l.s4 1983009808
        %v961 = vunpack.c.0.s8 %v960
        %v962 = vlaneseq
        %v963 = vshrl.u32 %v962, 7
        %v964 = vsub.s32 %v961, %v963
        %v965 = vrot.slane %v941, %v964
        %v967 = vunpack.c.l.s4 1983009808
        %v968 = vunpack.c.0.s8 %v967
        %v969 = vlaneseq
        %v970 = vshrl.u32 %v969, 7
        %v971 = vsub.s32 %v968, %v970
        %v972 = vrot.slane %v958, %v971
        %v973 = vcombine.low %v950, %v965
        %v974 = vcombine.high %v950, %v965
        %v976 = vunpack.c.l.s4 1934713408
        %v977 = vunpack.c.0.s8 %v976
        %v978 = vlaneseq
        %v979 = vshrl.u32 %v978, 7
        %v980 = vsub.s32 %v977, %v979
        %v981 = vrot.slane %v973, %v980
        %v983 = vunpack.c.l.s4 1934713408
        %v984 = vunpack.c.0.s8 %v983
        %v985 = vlaneseq
        %v986 = vshrl.u32 %v985, 7
        %v987 = vsub.s32 %v984, %v986
        %v988 = vrot.slane %v974, %v987
        %v989 = vcombine.low %v957, %v972
        %v990 = vcombine.high %v957, %v972
        %v992 = vunpack.c.l.s4 1934713408
        %v993 = vunpack.c.0.s8 %v992
        %v994 = vlaneseq
        %v995 = vshrl.u32 %v994, 7
        %v996 = vsub.s32 %v993, %v995
        %v997 = vrot.slane %v989, %v996
        %v999 = vunpack.c.l.s4 1934713408
        %v1000 = vunpack.c.0.s8 %v999
        %v1001 = vlaneseq
        %v1002 = vshrl.u32 %v1001, 7
        %v1003 = vsub.s32 %v1000, %v1002
        %v1004 = vrot.slane %v990, %v1003
        %v1005 = vcombine.high %v981, 0.0
        %v1006 = vcombine.high %v988, 0.0
        %v1007 = vcombine.high %v997, 0.0
        %v1008 = vcombine.high %v1004, 0.0
        %v1009 = vcombine.low %v981, %v988
        %v1011 = vunpack.c.l.s4 1983009808
        %v1012 = vunpack.c.0.s8 %v1011
        %v1013 = vlaneseq
        %v1014 = vshrl.u32 %v1013, 7
        %v1015 = vsub.s32 %v1012, %v1014
        %v1016 = vrot.slane %v1009, %v1015
        %v1017 = vcombine.low %v1005, %v1006
        %v1019 = vunpack.c.l.s4 1983009808
        %v1020 = vunpack.c.0.s8 %v1019
        %v1021 = vlaneseq
        %v1022 = vshrl.u32 %v1021, 7
        %v1023 = vsub.s32 %v1020, %v1022
        %v1024 = vrot.slane %v1017, %v1023
        %v1025 = vcombine.low %v997, %v1004
        %v1027 = vunpack.c.l.s4 1983009808
        %v1028 = vunpack.c.0.s8 %v1027
        %v1029 = vlaneseq
        %v1030 = vshrl.u32 %v1029, 7
        %v1031 = vsub.s32 %v1028, %v1030
        %v1032 = vrot.slane %v1025, %v1031
        %v1033 = vcombine.low %v1007, %v1008
        %v1035 = vunpack.c.l.s4 1983009808
        %v1036 = vunpack.c.0.s8 %v1035
        %v1037 = vlaneseq
        %v1038 = vshrl.u32 %v1037, 7
        %v1039 = vsub.s32 %v1036, %v1038
        %v1040 = vrot.slane %v1033, %v1039
        %v1041 = vcombine.low %v1016, %v1024
        %v1043 = vunpack.c.l.s4 1934713408
        %v1044 = vunpack.c.0.s8 %v1043
        %v1045 = vlaneseq
        %v1046 = vshrl.u32 %v1045, 7
        %v1047 = vsub.s32 %v1044, %v1046
        %v1048 = vrot.slane %v1041, %v1047
        %v1049 = vcombine.low %v1032, %v1040
        %v1051 = vunpack.c.l.s4 1934713408
        %v1052 = vunpack.c.0.s8 %v1051
        %v1053 = vlaneseq
        %v1054 = vshrl.u32 %v1053, 7
        %v1055 = vsub.s32 %v1052, %v1054
        %v1056 = vrot.slane %v1049, %v1055
        %v1057 = vcombine.low %v1048, %v1056
        %v1058 = vcombine.high %v1048, %v1056
        %v1059 = vpack.c.bf16 %v1057, %v1057
        %v1060 = vpack.c.bf16 %v1058, %v1058
        %vm1061 = vcmask 130048
        %v1063 = vsel %vm1061, %v815, 0
        %v1066 = vsel %vm1061, %v937, 0
        %1068 = vmatprep.subr.bf16.mxu0 0
        %1069 = vmatpush1.bf16.xpose.msra.mxu0 0
        %1070 = vmatprep.subr.bf16.mxu0 0
        %1071 = vmatpush1.bf16.xpose.msra.mxu0 0
        %1072 = vmatprep.subr.bf16.mxu0 0
        %1073 = vmatpush1.bf16.xpose.msra.mxu0 0
        %1074 = vmatprep.subr.bf16.mxu0 0
        %1075 = vmatpush1.bf16.xpose.msra.mxu0 0
        %1076 = vmatprep.subr.bf16.mxu0 0
        %1077 = vmatpush1.bf16.xpose.msra.mxu0 0
        %1078 = vmatprep.subr.bf16.mxu0 0
        %1079 = vmatpush1.bf16.xpose.msra.mxu0 0
        %1080 = vmatprep.subr.bf16.mxu0 0
        %1081 = vmatpush1.bf16.xpose.msra.mxu0 0
        %1082 = vmatprep.subr.bf16.mxu0 0
        %1083 = vmatpush1.bf16.xpose.msra.mxu0 %v1066
        %1084 = vmatprep.subr.bf16.mxu0 0
        %1085 = vmatpush2.bf16.xpose.msra.mxu0 0
        %1086 = vmatprep.subr.bf16.mxu0 0
        %1087 = vmatpush2.bf16.xpose.msra.mxu0 0
        %1088 = vmatprep.subr.bf16.mxu0 0
        %1089 = vmatpush2.bf16.xpose.msra.mxu0 0
        %1090 = vmatprep.subr.bf16.mxu0 0
        %1091 = vmatpush2.bf16.xpose.msra.mxu0 0
        %1092 = vmatprep.subr.bf16.mxu0 0
        %1093 = vmatpush2.bf16.xpose.msra.mxu0 0
        %1094 = vmatprep.subr.bf16.mxu0 0
        %1095 = vmatpush2.bf16.xpose.msra.mxu0 0
        %1096 = vmatprep.subr.bf16.mxu0 0
        %1097 = vmatpush2.bf16.xpose.msra.mxu0 0
        %1098 = vmatprep.subr.bf16.mxu0 0
        %1099 = vmatpush2.bf16.xpose.msra.mxu0 0
        %1100 = vmatprep.mubr.bf16.mxu0 0
        %1101 = vmatmul.mubr.bf16.gmra.mxu0 %v1063
        %v1102 = vpop.f32.mrf.mxu0
        %v1103 = vadd.f32 0.0, %v1102
        %v1104 = vpop.f32.mrf.mxu0
        %v1105 = vpop.f32.mrf.mxu0
        %v1106 = vpop.f32.mrf.mxu0
        %1107 = vdwg.mxu0
        %v1109 = vsel %vm1061, %v816, 0
        %v1112 = vsel %vm1061, %v938, 0
        %1114 = vmatprep.subr.bf16.mxu0 0
        %1115 = vmatpush1.bf16.xpose.msra.mxu0 0
        %1116 = vmatprep.subr.bf16.mxu0 0
        %1117 = vmatpush1.bf16.xpose.msra.mxu0 0
        %1118 = vmatprep.subr.bf16.mxu0 0
        %1119 = vmatpush1.bf16.xpose.msra.mxu0 0
        %1120 = vmatprep.subr.bf16.mxu0 0
        %1121 = vmatpush1.bf16.xpose.msra.mxu0 0
        %1122 = vmatprep.subr.bf16.mxu0 0
        %1123 = vmatpush1.bf16.xpose.msra.mxu0 0
        %1124 = vmatprep.subr.bf16.mxu0 0
        %1125 = vmatpush1.bf16.xpose.msra.mxu0 0
        %1126 = vmatprep.subr.bf16.mxu0 0
        %1127 = vmatpush1.bf16.xpose.msra.mxu0 0
        %1128 = vmatprep.subr.bf16.mxu0 0
        %1129 = vmatpush1.bf16.xpose.msra.mxu0 %v1112
        %1130 = vmatprep.subr.bf16.mxu0 0
        %1131 = vmatpush2.bf16.xpose.msra.mxu0 0
        %1132 = vmatprep.subr.bf16.mxu0 0
        %1133 = vmatpush2.bf16.xpose.msra.mxu0 0
        %1134 = vmatprep.subr.bf16.mxu0 0
        %1135 = vmatpush2.bf16.xpose.msra.mxu0 0
        %1136 = vmatprep.subr.bf16.mxu0 0
        %1137 = vmatpush2.bf16.xpose.msra.mxu0 0
        %1138 = vmatprep.subr.bf16.mxu0 0
        %1139 = vmatpush2.bf16.xpose.msra.mxu0 0
        %1140 = vmatprep.subr.bf16.mxu0 0
        %1141 = vmatpush2.bf16.xpose.msra.mxu0 0
        %1142 = vmatprep.subr.bf16.mxu0 0
        %1143 = vmatpush2.bf16.xpose.msra.mxu0 0
        %1144 = vmatprep.subr.bf16.mxu0 0
        %1145 = vmatpush2.bf16.xpose.msra.mxu0 0
        %1146 = vmatprep.mubr.bf16.mxu0 0
        %1147 = vmatmul.mubr.bf16.gmra.mxu0 %v1109
        %v1148 = vpop.f32.mrf.mxu0
        %v1149 = vadd.f32 0.0, %v1148
        %v1150 = vpop.f32.mrf.mxu0
        %v1151 = vpop.f32.mrf.mxu0
        %v1152 = vpop.f32.mrf.mxu0
        %1153 = vdwg.mxu0
        %v1154 = vlaneseq
        %v1155 = vshrl.u32 %v1154, 7
        %v1156 = vlaneseq
        %v1157 = vand.u32 %v1156, 127
        %vm1158 = vcmp.le.s32.totalorder %v1157, %v1155
        %v1159 = vsel %vm1158, 1, 0
        %vm1160 = vcmp.eq.s32.totalorder %v1159, 1
        %v1161 = vsel %vm1160, %v1103, -1e+30
        %v1162 = vsel %vm1160, %v1149, -1e+30
        %vm1163 = vcmask 64512
        %v1164 = vsel %vm1163, %v1161, -inf
        %1165 = vmax.xlane.f32.xlu0 %v1164
        %v1166 = vpop.xlane.xlu0 %1165
        %v1167 = vsel %vm1163, %v1162, -inf
        %1168 = vmax.xlane.f32.xlu0 %v1167
        %v1169 = vpop.xlane.xlu0 %1168
        %v1170 = vsub.f32 %v1161, %v1166
        %v1171 = vsub.f32 %v1162, %v1169
        %v1172 = vmul.f32 %v1170, 1.442695
        %v1173 = vpow.pop %v1172
        %v1174 = vmul.f32 %v1171, 1.442695
        %v1175 = vpow.pop %v1174
        %v1176 = vsel %vm1163, %v1173, 0.0
        %1177 = vadd.xlane.f32.xlu0 %v1176
        %v1178 = vpop.xlane.xlu0 %1177
        %v1179 = vsel %vm1163, %v1175, 0.0
        %1180 = vadd.xlane.f32.xlu0 %v1179
        %v1181 = vpop.xlane.xlu0 %1180
        %v1182 = vrcp.pop %v1178
        %v1183 = vrcp.pop %v1181
        %v1184 = vmul.f32 %v1173, %v1182
        %v1185 = vmul.f32 %v1175, %v1183
        %v1186 = vpack.c.bf16 %v1184, %v1184
        %v1187 = vpack.c.bf16 %v1185, %v1185
        %v1189 = vsel %vm1163, %v1186, 0
        %vm1191 = vcmask 1043456
        %v1193 = vsel %vm1191, %v1059, 0
        %1195 = vmatprep.subr.bf16.mxu0 0
        %1196 = vmatpush1.bf16.msra.mxu0 0
        %1197 = vmatprep.subr.bf16.mxu0 0
        %1198 = vmatpush1.bf16.msra.mxu0 0
        %1199 = vmatprep.subr.bf16.mxu0 0
        %1200 = vmatpush1.bf16.msra.mxu0 0
        %1201 = vmatprep.subr.bf16.mxu0 0
        %1202 = vmatpush1.bf16.msra.mxu0 0
        %1203 = vmatprep.subr.bf16.mxu0 0
        %1204 = vmatpush1.bf16.msra.mxu0 0
        %1205 = vmatprep.subr.bf16.mxu0 0
        %1206 = vmatpush1.bf16.msra.mxu0 0
        %1207 = vmatprep.subr.bf16.mxu0 0
        %1208 = vmatpush1.bf16.msra.mxu0 0
        %1209 = vmatprep.subr.bf16.mxu0 0
        %1210 = vmatpush1.bf16.msra.mxu0 %v1193
        %1211 = vmatprep.subr.bf16.mxu0 0
        %1212 = vmatpush2.bf16.msra.mxu0 0
        %1213 = vmatprep.subr.bf16.mxu0 0
        %1214 = vmatpush2.bf16.msra.mxu0 0
        %1215 = vmatprep.subr.bf16.mxu0 0
        %1216 = vmatpush2.bf16.msra.mxu0 0
        %1217 = vmatprep.subr.bf16.mxu0 0
        %1218 = vmatpush2.bf16.msra.mxu0 0
        %1219 = vmatprep.subr.bf16.mxu0 0
        %1220 = vmatpush2.bf16.msra.mxu0 0
        %1221 = vmatprep.subr.bf16.mxu0 0
        %1222 = vmatpush2.bf16.msra.mxu0 0
        %1223 = vmatprep.subr.bf16.mxu0 0
        %1224 = vmatpush2.bf16.msra.mxu0 0
        %1225 = vmatprep.subr.bf16.mxu0 0
        %1226 = vmatpush2.bf16.msra.mxu0 0
        %1227 = vmatprep.mubr.bf16.mxu0 0
        %1228 = vmatmul.mubr.bf16.gmra.mxu0 %v1189
        %v1229 = vpop.f32.mrf.mxu0
        %v1230 = vadd.f32 0.0, %v1229
        %v1231 = vpop.f32.mrf.mxu0
        %v1232 = vpop.f32.mrf.mxu0
        %v1233 = vpop.f32.mrf.mxu0
        %1234 = vdwg.mxu0
        %v1236 = vsel %vm1163, %v1187, 0
        %v1239 = vsel %vm1191, %v1060, 0
        %1241 = vmatprep.subr.bf16.mxu0 0
        %1242 = vmatpush1.bf16.msra.mxu0 0
        %1243 = vmatprep.subr.bf16.mxu0 0
        %1244 = vmatpush1.bf16.msra.mxu0 0
        %1245 = vmatprep.subr.bf16.mxu0 0
        %1246 = vmatpush1.bf16.msra.mxu0 0
        %1247 = vmatprep.subr.bf16.mxu0 0
        %1248 = vmatpush1.bf16.msra.mxu0 0
        %1249 = vmatprep.subr.bf16.mxu0 0
        %1250 = vmatpush1.bf16.msra.mxu0 0
        %1251 = vmatprep.subr.bf16.mxu0 0
        %1252 = vmatpush1.bf16.msra.mxu0 0
        %1253 = vmatprep.subr.bf16.mxu0 0
        %1254 = vmatpush1.bf16.msra.mxu0 0
        %1255 = vmatprep.subr.bf16.mxu0 0
        %1256 = vmatpush1.bf16.msra.mxu0 %v1239
        %1257 = vmatprep.subr.bf16.mxu0 0
        %1258 = vmatpush2.bf16.msra.mxu0 0
        %1259 = vmatprep.subr.bf16.mxu0 0
        %1260 = vmatpush2.bf16.msra.mxu0 0
        %1261 = vmatprep.subr.bf16.mxu0 0
        %1262 = vmatpush2.bf16.msra.mxu0 0
        %1263 = vmatprep.subr.bf16.mxu0 0
        %1264 = vmatpush2.bf16.msra.mxu0 0
        %1265 = vmatprep.subr.bf16.mxu0 0
        %1266 = vmatpush2.bf16.msra.mxu0 0
        %1267 = vmatprep.subr.bf16.mxu0 0
        %1268 = vmatpush2.bf16.msra.mxu0 0
        %1269 = vmatprep.subr.bf16.mxu0 0
        %1270 = vmatpush2.bf16.msra.mxu0 0
        %1271 = vmatprep.subr.bf16.mxu0 0
        %1272 = vmatpush2.bf16.msra.mxu0 0
        %1273 = vmatprep.mubr.bf16.mxu0 0
        %1274 = vmatmul.mubr.bf16.gmra.mxu0 %v1236
        %v1275 = vpop.f32.mrf.mxu0
        %v1276 = vadd.f32 0.0, %v1275
        %v1277 = vpop.f32.mrf.mxu0
        %v1278 = vpop.f32.mrf.mxu0
        %v1279 = vpop.f32.mrf.mxu0
        %1280 = vdwg.mxu0
        %v1281 = vcombine.high %v1230, 0.0
        %v1283 = vunpack.c.l.s4 1983009808
        %v1284 = vunpack.c.0.s8 %v1283
        %v1285 = vlaneseq
        %v1286 = vshrl.u32 %v1285, 7
        %v1287 = vsub.s32 %v1284, %v1286
        %v1288 = vrot.slane %v1230, %v1287
        %v1290 = vunpack.c.l.s4 1983009808
        %v1291 = vunpack.c.0.s8 %v1290
        %v1292 = vlaneseq
        %v1293 = vshrl.u32 %v1292, 7
        %v1294 = vsub.s32 %v1291, %v1293
        %v1295 = vrot.slane %v1281, %v1294
        %v1296 = vcombine.high %v1276, 0.0
        %v1298 = vunpack.c.l.s4 1983009808
        %v1299 = vunpack.c.0.s8 %v1298
        %v1300 = vlaneseq
        %v1301 = vshrl.u32 %v1300, 7
        %v1302 = vsub.s32 %v1299, %v1301
        %v1303 = vrot.slane %v1276, %v1302
        %v1305 = vunpack.c.l.s4 1983009808
        %v1306 = vunpack.c.0.s8 %v1305
        %v1307 = vlaneseq
        %v1308 = vshrl.u32 %v1307, 7
        %v1309 = vsub.s32 %v1306, %v1308
        %v1310 = vrot.slane %v1296, %v1309
        %v1311 = vcombine.low %v1288, %v1303
        %v1312 = vcombine.high %v1288, %v1303
        %v1314 = vunpack.c.l.s4 1934713408
        %v1315 = vunpack.c.0.s8 %v1314
        %v1316 = vlaneseq
        %v1317 = vshrl.u32 %v1316, 7
        %v1318 = vsub.s32 %v1315, %v1317
        %v1319 = vrot.slane %v1311, %v1318
        %v1321 = vunpack.c.l.s4 1934713408
        %v1322 = vunpack.c.0.s8 %v1321
        %v1323 = vlaneseq
        %v1324 = vshrl.u32 %v1323, 7
        %v1325 = vsub.s32 %v1322, %v1324
        %v1326 = vrot.slane %v1312, %v1325
        %v1327 = vcombine.low %v1295, %v1310
        %v1328 = vcombine.high %v1295, %v1310
        %v1330 = vunpack.c.l.s4 1934713408
        %v1331 = vunpack.c.0.s8 %v1330
        %v1332 = vlaneseq
        %v1333 = vshrl.u32 %v1332, 7
        %v1334 = vsub.s32 %v1331, %v1333
        %v1335 = vrot.slane %v1327, %v1334
        %v1337 = vunpack.c.l.s4 1934713408
        %v1338 = vunpack.c.0.s8 %v1337
        %v1339 = vlaneseq
        %v1340 = vshrl.u32 %v1339, 7
        %v1341 = vsub.s32 %v1338, %v1340
        %v1342 = vrot.slane %v1328, %v1341
        %v1343 = vcombine.high %v1319, 0.0
        %v1344 = vcombine.high %v1326, 0.0
        %v1345 = vcombine.high %v1335, 0.0
        %v1346 = vcombine.high %v1342, 0.0
        %v1347 = vcombine.low %v1319, %v1326
        %v1349 = vunpack.c.l.s4 1983009808
        %v1350 = vunpack.c.0.s8 %v1349
        %v1351 = vlaneseq
        %v1352 = vshrl.u32 %v1351, 7
        %v1353 = vsub.s32 %v1350, %v1352
        %v1354 = vrot.slane %v1347, %v1353
        %v1355 = vcombine.low %v1343, %v1344
        %v1357 = vunpack.c.l.s4 1983009808
        %v1358 = vunpack.c.0.s8 %v1357
        %v1359 = vlaneseq
        %v1360 = vshrl.u32 %v1359, 7
        %v1361 = vsub.s32 %v1358, %v1360
        %v1362 = vrot.slane %v1355, %v1361
        %v1363 = vcombine.low %v1335, %v1342
        %v1365 = vunpack.c.l.s4 1983009808
        %v1366 = vunpack.c.0.s8 %v1365
        %v1367 = vlaneseq
        %v1368 = vshrl.u32 %v1367, 7
        %v1369 = vsub.s32 %v1366, %v1368
        %v1370 = vrot.slane %v1363, %v1369
        %v1371 = vcombine.low %v1345, %v1346
        %v1373 = vunpack.c.l.s4 1983009808
        %v1374 = vunpack.c.0.s8 %v1373
        %v1375 = vlaneseq
        %v1376 = vshrl.u32 %v1375, 7
        %v1377 = vsub.s32 %v1374, %v1376
        %v1378 = vrot.slane %v1371, %v1377
        %v1379 = vcombine.low %v1354, %v1362
        %v1381 = vunpack.c.l.s4 1934713408
        %v1382 = vunpack.c.0.s8 %v1381
        %v1383 = vlaneseq
        %v1384 = vshrl.u32 %v1383, 7
        %v1385 = vsub.s32 %v1382, %v1384
        %v1386 = vrot.slane %v1379, %v1385
        %v1387 = vcombine.low %v1370, %v1378
        %v1389 = vunpack.c.l.s4 1934713408
        %v1390 = vunpack.c.0.s8 %v1389
        %v1391 = vlaneseq
        %v1392 = vshrl.u32 %v1391, 7
        %v1393 = vsub.s32 %v1390, %v1392
        %v1394 = vrot.slane %v1387, %v1393
        %v1395 = vcombine.low %v1386, %v1394
        %v1396 = vcombine.high %v1386, %v1394
        %1398 = vrot.lane.b32.xlu0 %v1396, 16
        %v1399 = vpop.permute.xlu0 %1398
        %v1401 = vsel %vm1061, %v1395, %v1399
        %v1402 = vld [vmem:[%s462] sm:$0xf]
        %v1403 = vld [vmem:[%s462 + $0x4] sm:$0xf]
        %v1404 = vld [vmem:[%s462 + $0x8] sm:$0xf]
        %v1405 = vld [vmem:[%s462 + $0xc] sm:$0xf]
        %v1406 = vpack.c.bf16 %v1401, %v1401
        %v1407 = vlaneseq
        %v1408 = vshrl.u32 %v1407, 7
        %v1409 = vsub.s32 3, %v1408
        %v1410 = vrot.slane %v493, %v1409
        %v1415 = vunpack.c.l.b16 %v1402
        %v1416 = vunpack.c.l.b16 %v1403
        %v1417 = vunpack.c.l.b16 %v1404
        %v1418 = vunpack.c.l.b16 %v1405
        %v1419 = vpack.c.b16 %v1416, %v1415
        %v1420 = vpack.c.b16 %v1418, %v1417
        %v1422 = vsel %vm523, %v1406, 0
        %v1425 = vsel %vm523, %v1419, 0
        %v1428 = vsel %vm523, %v1420, 0
        %1430 = vmatprep.subr.bf16.mxu0 0
        %1431 = vmatpush1.bf16.xpose.msra.mxu0 0
        %1432 = vmatprep.subr.bf16.mxu0 0
        %1433 = vmatpush1.bf16.xpose.msra.mxu0 0
        %1434 = vmatprep.subr.bf16.mxu0 0
        %1435 = vmatpush1.bf16.xpose.msra.mxu0 0
        %1436 = vmatprep.subr.bf16.mxu0 0
        %1437 = vmatpush1.bf16.xpose.msra.mxu0 0
        %1438 = vmatprep.subr.bf16.mxu0 0
        %1439 = vmatpush1.bf16.xpose.msra.mxu0 0
        %1440 = vmatprep.subr.bf16.mxu0 0
        %1441 = vmatpush1.bf16.xpose.msra.mxu0 0
        %1442 = vmatprep.subr.bf16.mxu0 0
        %1443 = vmatpush1.bf16.xpose.msra.mxu0 %v1428
        %1444 = vmatprep.subr.bf16.mxu0 0
        %1445 = vmatpush1.bf16.xpose.msra.mxu0 %v1425
        %1446 = vmatprep.subr.bf16.mxu0 0
        %1447 = vmatpush2.bf16.xpose.msra.mxu0 0
        %1448 = vmatprep.subr.bf16.mxu0 0
        %1449 = vmatpush2.bf16.xpose.msra.mxu0 0
        %1450 = vmatprep.subr.bf16.mxu0 0
        %1451 = vmatpush2.bf16.xpose.msra.mxu0 0
        %1452 = vmatprep.subr.bf16.mxu0 0
        %1453 = vmatpush2.bf16.xpose.msra.mxu0 0
        %1454 = vmatprep.subr.bf16.mxu0 0
        %1455 = vmatpush2.bf16.xpose.msra.mxu0 0
        %1456 = vmatprep.subr.bf16.mxu0 0
        %1457 = vmatpush2.bf16.xpose.msra.mxu0 0
        %1458 = vmatprep.subr.bf16.mxu0 0
        %1459 = vmatpush2.bf16.xpose.msra.mxu0 0
        %1460 = vmatprep.subr.bf16.mxu0 0
        %1461 = vmatpush2.bf16.xpose.msra.mxu0 0
        %1462 = vmatprep.mubr.bf16.mxu0 0
        %1463 = vmatmul.mubr.bf16.gmra.mxu0 %v1422
        %v1464 = vpop.f32.mrf.mxu0
        %v1465 = vadd.f32 %v1410, %v1464
        %v1466 = vpop.f32.mrf.mxu0
        %v1467 = vpop.f32.mrf.mxu0
        %v1468 = vpop.f32.mrf.mxu0
        %1469 = vdwg.mxu0
        %v1470 = vadd.f32 %v492, %v1465
        %v1471 = vsel %vm523, %v1470, 0.0
        %1472 = vadd.xlane.f32.xlu0 %v1471
        %v1473 = vpop.xlane.xlu0 %1472
        %v1474 = vrcp.pop 32.0
        %v1475 = vmul.f32 %v1473, %v1474
        %v1476 = vsub.f32 %v1470, %v1475
        %v1477 = vmul.f32 %v1476, %v1476
        %v1478 = vsel %vm523, %v1477, 0.0
        %1479 = vadd.xlane.f32.xlu0 %v1478
        %v1480 = vpop.xlane.xlu0 %1479
        %v1481 = vmul.f32 %v1480, %v1474
        %v1482 = vadd.f32 %v1481, 1e-05
        %v1483 = vrsqrt.pop %v1482
        %v1484 = vmul.f32 %v1476, %v1483
        %v1485 = vlaneseq
        %v1486 = vshrl.u32 %v1485, 7
        %v1487 = vsub.s32 4, %v1486
        %v1488 = vrot.slane %v493, %v1487
        %v1489 = vmul.f32 %v1484, %v1488
        %v1490 = vlaneseq
        %v1491 = vshrl.u32 %v1490, 7
        %v1492 = vsub.s32 5, %v1491
        %v1493 = vrot.slane %v493, %v1492
        %v1494 = vadd.f32 %v1489, %v1493
        %v1495 = vld [vmem:[%s467] sm:$0xf]
        %v1496 = vld [vmem:[%s467 + $0x4] sm:$0xf]
        %v1497 = vld [vmem:[%s467 + $0x8] sm:$0xf]
        %v1498 = vld [vmem:[%s467 + $0xc] sm:$0xf]
        %v1499 = vld [vmem:[%s467 + $0x10] sm:$0xf]
        %v1500 = vld [vmem:[%s467 + $0x14] sm:$0xf]
        %v1501 = vld [vmem:[%s467 + $0x18] sm:$0xf]
        %v1502 = vld [vmem:[%s467 + $0x1c] sm:$0xf]
        %v1503 = vpack.c.bf16 %v1494, %v1494
        %v1505 = vlaneseq
        %v1506 = vshrl.u32 %v1505, 7
        %v1507 = vsub.s32 0, %v1506
        %v1508 = vrot.slane %v495, %v1507
        %v1518 = vunpack.c.l.b16 %v1495
        %v1519 = vunpack.c.l.b16 %v1496
        %v1520 = vunpack.c.l.b16 %v1497
        %v1521 = vunpack.c.l.b16 %v1498
        %v1522 = vunpack.c.l.b16 %v1499
        %v1523 = vunpack.c.l.b16 %v1500
        %v1524 = vunpack.c.l.b16 %v1501
        %v1525 = vunpack.c.l.b16 %v1502
        %v1526 = vpack.c.b16 %v1519, %v1518
        %v1527 = vpack.c.b16 %v1521, %v1520
        %v1528 = vpack.c.b16 %v1523, %v1522
        %v1529 = vpack.c.b16 %v1525, %v1524
        %v1531 = vsel %vm523, %v1503, 0
        %v1534 = vsel %vm523, %v1526, 0
        %v1537 = vsel %vm523, %v1527, 0
        %v1540 = vsel %vm523, %v1528, 0
        %v1543 = vsel %vm523, %v1529, 0
        %1545 = vmatprep.subr.bf16.mxu0 0
        %1546 = vmatpush1.bf16.xpose.msra.mxu0 0
        %1547 = vmatprep.subr.bf16.mxu0 0
        %1548 = vmatpush1.bf16.xpose.msra.mxu0 0
        %1549 = vmatprep.subr.bf16.mxu0 0
        %1550 = vmatpush1.bf16.xpose.msra.mxu0 0
        %1551 = vmatprep.subr.bf16.mxu0 0
        %1552 = vmatpush1.bf16.xpose.msra.mxu0 0
        %1553 = vmatprep.subr.bf16.mxu0 0
        %1554 = vmatpush1.bf16.xpose.msra.mxu0 %v1543
        %1555 = vmatprep.subr.bf16.mxu0 0
        %1556 = vmatpush1.bf16.xpose.msra.mxu0 %v1540
        %1557 = vmatprep.subr.bf16.mxu0 0
        %1558 = vmatpush1.bf16.xpose.msra.mxu0 %v1537
        %1559 = vmatprep.subr.bf16.mxu0 0
        %1560 = vmatpush1.bf16.xpose.msra.mxu0 %v1534
        %1561 = vmatprep.subr.bf16.mxu0 0
        %1562 = vmatpush2.bf16.xpose.msra.mxu0 0
        %1563 = vmatprep.subr.bf16.mxu0 0
        %1564 = vmatpush2.bf16.xpose.msra.mxu0 0
        %1565 = vmatprep.subr.bf16.mxu0 0
        %1566 = vmatpush2.bf16.xpose.msra.mxu0 0
        %1567 = vmatprep.subr.bf16.mxu0 0
        %1568 = vmatpush2.bf16.xpose.msra.mxu0 0
        %1569 = vmatprep.subr.bf16.mxu0 0
        %1570 = vmatpush2.bf16.xpose.msra.mxu0 0
        %1571 = vmatprep.subr.bf16.mxu0 0
        %1572 = vmatpush2.bf16.xpose.msra.mxu0 0
        %1573 = vmatprep.subr.bf16.mxu0 0
        %1574 = vmatpush2.bf16.xpose.msra.mxu0 0
        %1575 = vmatprep.subr.bf16.mxu0 0
        %1576 = vmatpush2.bf16.xpose.msra.mxu0 0
        %1577 = vmatprep.mubr.bf16.mxu0 0
        %1578 = vmatmul.mubr.bf16.gmra.mxu0 %v1531
        %v1579 = vpop.f32.mrf.mxu0
        %v1580 = vadd.f32 %v1508, %v1579
        %v1581 = vpop.f32.mrf.mxu0
        %v1582 = vpop.f32.mrf.mxu0
        %v1583 = vpop.f32.mrf.mxu0
        %1584 = vdwg.mxu0
        %v1585 = vmax.f32 %v1580, 0.0
        %v1586 = vld [vmem:[%s472] sm:$0xf]
        %v1587 = vld [vmem:[%s472 + $0x4] sm:$0xf]
        %v1588 = vld [vmem:[%s472 + $0x8] sm:$0xf]
        %v1589 = vld [vmem:[%s472 + $0xc] sm:$0xf]
        %v1590 = vpack.c.bf16 %v1585, %v1585
        %v1591 = vlaneseq
        %v1592 = vshrl.u32 %v1591, 7
        %v1593 = vsub.s32 6, %v1592
        %v1594 = vrot.slane %v493, %v1593
        %v1599 = vunpack.c.l.b16 %v1586
        %v1600 = vunpack.c.l.b16 %v1587
        %v1601 = vunpack.c.l.b16 %v1588
        %v1602 = vunpack.c.l.b16 %v1589
        %v1603 = vpack.c.b16 %v1600, %v1599
        %v1604 = vpack.c.b16 %v1602, %v1601
        %vm1605 = vcmask 523264
        %v1607 = vsel %vm1605, %v1590, 0
        %v1610 = vsel %vm1605, %v1603, 0
        %v1613 = vsel %vm1605, %v1604, 0
        %1615 = vmatprep.subr.bf16.mxu0 0
        %1616 = vmatpush1.bf16.xpose.msra.mxu0 0
        %1617 = vmatprep.subr.bf16.mxu0 0
        %1618 = vmatpush1.bf16.xpose.msra.mxu0 0
        %1619 = vmatprep.subr.bf16.mxu0 0
        %1620 = vmatpush1.bf16.xpose.msra.mxu0 0
        %1621 = vmatprep.subr.bf16.mxu0 0
        %1622 = vmatpush1.bf16.xpose.msra.mxu0 0
        %1623 = vmatprep.subr.bf16.mxu0 0
        %1624 = vmatpush1.bf16.xpose.msra.mxu0 0
        %1625 = vmatprep.subr.bf16.mxu0 0
        %1626 = vmatpush1.bf16.xpose.msra.mxu0 0
        %1627 = vmatprep.subr.bf16.mxu0 0
        %1628 = vmatpush1.bf16.xpose.msra.mxu0 %v1613
        %1629 = vmatprep.subr.bf16.mxu0 0
        %1630 = vmatpush1.bf16.xpose.msra.mxu0 %v1610
        %1631 = vmatprep.subr.bf16.mxu0 0
        %1632 = vmatpush2.bf16.xpose.msra.mxu0 0
        %1633 = vmatprep.subr.bf16.mxu0 0
        %1634 = vmatpush2.bf16.xpose.msra.mxu0 0
        %1635 = vmatprep.subr.bf16.mxu0 0
        %1636 = vmatpush2.bf16.xpose.msra.mxu0 0
        %1637 = vmatprep.subr.bf16.mxu0 0
        %1638 = vmatpush2.bf16.xpose.msra.mxu0 0
        %1639 = vmatprep.subr.bf16.mxu0 0
        %1640 = vmatpush2.bf16.xpose.msra.mxu0 0
        %1641 = vmatprep.subr.bf16.mxu0 0
        %1642 = vmatpush2.bf16.xpose.msra.mxu0 0
        %1643 = vmatprep.subr.bf16.mxu0 0
        %1644 = vmatpush2.bf16.xpose.msra.mxu0 0
        %1645 = vmatprep.subr.bf16.mxu0 0
        %1646 = vmatpush2.bf16.xpose.msra.mxu0 0
        %1647 = vmatprep.mubr.bf16.mxu0 0
        %1648 = vmatmul.mubr.bf16.gmra.mxu0 %v1607
        %v1649 = vpop.f32.mrf.mxu0
        %v1650 = vadd.f32 %v1594, %v1649
        %v1651 = vpop.f32.mrf.mxu0
        %v1652 = vpop.f32.mrf.mxu0
        %v1653 = vpop.f32.mrf.mxu0
        %1654 = vdwg.mxu0
        %v1655 = vadd.f32 %v1494, %v1650
        %v1656 = vsel %vm523, %v1655, 0.0
        %1657 = vadd.xlane.f32.xlu0 %v1656
        %v1658 = vpop.xlane.xlu0 %1657
        %v1659 = vmul.f32 %v1658, %v1474
        %v1660 = vsub.f32 %v1655, %v1659
        %v1661 = vmul.f32 %v1660, %v1660
        %v1662 = vsel %vm523, %v1661, 0.0
        %1663 = vadd.xlane.f32.xlu0 %v1662
        %v1664 = vpop.xlane.xlu0 %1663
        %v1665 = vmul.f32 %v1664, %v1474
        %v1666 = vadd.f32 %v1665, 1e-05
        %v1667 = vrsqrt.pop %v1666
        %v1668 = vmul.f32 %v1660, %v1667
        %v1669 = vlaneseq
        %v1670 = vshrl.u32 %v1669, 7
        %v1671 = vsub.s32 7, %v1670
        %v1672 = vrot.slane %v493, %v1671
        %v1673 = vmul.f32 %v1668, %v1672
        %v1674 = vlaneseq
        %v1675 = vshrl.u32 %v1674, 7
        %v1676 = vsub.s32 0, %v1675
        %v1677 = vrot.slane %v494, %v1676
        %v1678 = vadd.f32 %v1673, %v1677
        %1679 = vst.msk [vmem:[#allocation2] sm:$0xff] %vm523, %v1678
        %p1680 = scmp.eq.s32.totalorder %s29, 1
        // Predicated region
        $region65: #{tpu_custom_call.1} parent=59 // pred_check
          %p1681 = pneg %p1680
        $region66: #{tpu_custom_call.1} parent=59 // pred_check_branch
          %1683 = sbr.rel (%p1681) target = $region68
        $region67: #{tpu_custom_call.1} parent=59 // pred_region
          %v1684 = vld [vmem:[%s8] sm:$0xf]
          %v1685 = vld [vmem:[%s8 + $0x4] sm:$0xf]
          %v1686 = vld [vmem:[%s8 + $0x8] sm:$0xf]
          %v1687 = vld [vmem:[%s8 + $0xc] sm:$0xf]
          %v1688 = vld [vmem:[%s8 + $0x10] sm:$0xf]
          %v1689 = vld [vmem:[%s8 + $0x14] sm:$0xf]
          %v1690 = vld [vmem:[%s8 + $0x18] sm:$0x1]
          %v1691 = vpack.c.bf16 %v1678, %v1678
          %v1692 = vld [vmem:[%s9] sm:$0x1]
          %v1694 = vlaneseq
          %v1695 = vshrl.u32 %v1694, 7
          %v1696 = vsub.s32 0, %v1695
          %v1697 = vrot.slane %v1692, %v1696
          %v1706 = vunpack.c.l.b16 %v1684
          %v1707 = vunpack.c.l.b16 %v1685
          %v1708 = vunpack.c.l.b16 %v1686
          %v1709 = vunpack.c.l.b16 %v1687
          %v1710 = vunpack.c.l.b16 %v1688
          %v1711 = vunpack.c.l.b16 %v1689
          %v1712 = vunpack.c.l.b16 %v1690
          %v1713 = vpack.c.b16 %v1707, %v1706
          %v1714 = vpack.c.b16 %v1709, %v1708
          %v1715 = vpack.c.b16 %v1711, %v1710
          %v1716 = vpack.c.b16 %v1712, %v1712
          %v1718 = vsel %vm523, %v1691, 0
          %v1721 = vsel %vm523, %v1713, 0
          %v1724 = vsel %vm523, %v1714, 0
          %v1727 = vsel %vm523, %v1715, 0
          %v1730 = vsel %vm523, %v1716, 0
          %1732 = vmatprep.subr.bf16.mxu0 0
          %1733 = vmatpush1.bf16.xpose.msra.mxu0 0
          %1734 = vmatprep.subr.bf16.mxu0 0
          %1735 = vmatpush1.bf16.xpose.msra.mxu0 0
          %1736 = vmatprep.subr.bf16.mxu0 0
          %1737 = vmatpush1.bf16.xpose.msra.mxu0 0
          %1738 = vmatprep.subr.bf16.mxu0 0
          %1739 = vmatpush1.bf16.xpose.msra.mxu0 0
          %1740 = vmatprep.subr.bf16.mxu0 0
          %1741 = vmatpush1.bf16.xpose.msra.mxu0 %v1730
          %1742 = vmatprep.subr.bf16.mxu0 0
          %1743 = vmatpush1.bf16.xpose.msra.mxu0 %v1727
          %1744 = vmatprep.subr.bf16.mxu0 0
          %1745 = vmatpush1.bf16.xpose.msra.mxu0 %v1724
          %1746 = vmatprep.subr.bf16.mxu0 0
          %1747 = vmatpush1.bf16.xpose.msra.mxu0 %v1721
          %1748 = vmatprep.subr.bf16.mxu0 0
          %1749 = vmatpush2.bf16.xpose.msra.mxu0 0
          %1750 = vmatprep.subr.bf16.mxu0 0
          %1751 = vmatpush2.bf16.xpose.msra.mxu0 0
          %1752 = vmatprep.subr.bf16.mxu0 0
          %1753 = vmatpush2.bf16.xpose.msra.mxu0 0
          %1754 = vmatprep.subr.bf16.mxu0 0
          %1755 = vmatpush2.bf16.xpose.msra.mxu0 0
          %1756 = vmatprep.subr.bf16.mxu0 0
          %1757 = vmatpush2.bf16.xpose.msra.mxu0 0
          %1758 = vmatprep.subr.bf16.mxu0 0
          %1759 = vmatpush2.bf16.xpose.msra.mxu0 0
          %1760 = vmatprep.subr.bf16.mxu0 0
          %1761 = vmatpush2.bf16.xpose.msra.mxu0 0
          %1762 = vmatprep.subr.bf16.mxu0 0
          %1763 = vmatpush2.bf16.xpose.msra.mxu0 0
          %1764 = vmatprep.mubr.bf16.mxu0 0
          %1765 = vmatmul.mubr.bf16.gmra.mxu0 %v1718
          %v1766 = vpop.f32.mrf.mxu0
          %v1767 = vadd.f32 %v1697, %v1766
          %v1768 = vpop.f32.mrf.mxu0
          %v1769 = vpop.f32.mrf.mxu0
          %v1770 = vpop.f32.mrf.mxu0
          %1771 = vdwg.mxu0
          %vm1772 = vcmask 408576
          %v1773 = vsel %vm1772, %v1767, -inf
          %1774 = vmax.xlane.f32.xlu0 %v1773
          %v1775 = vpop.xlane.xlu0 %1774
          %v1776 = vsub.f32 %v1767, %v1775
          %v1777 = vmul.f32 %v1776, 1.442695
          %v1778 = vpow.pop %v1777
          %v1779 = vsel %vm1772, %v1778, 0.0
          %1780 = vadd.xlane.f32.xlu0 %v1779
          %v1781 = vpop.xlane.xlu0 %1780
          %v1782 = vlog2.pop %v1781
          %v1783 = vmul.f32 %v1782, 0.6931472
          %v1784 = vsub.f32 %v1776, %v1783
          %1785 = vst.msk [vmem:[%s448] sm:$0xff] %vm1772, %v1784
        $region68: #{tpu_custom_call.1} parent=59 // pred_fallthru
          _
        %s1786 = sand.u32 %s289, 1
        %s1787 = scalar_lea.sflag [#allocation4], %s1786
        %s1788 = sand.u32 %s289, 1
        %s1789 = smul.addr %s1788, 8
        %s1790 = scalar_lea.vmem [#allocation3], %s1789
        // Predicated region
        $region69: #{tpu_custom_call.1} parent=59 // pred_check
          %p1791 = pneg %p299
        $region70: #{tpu_custom_call.1} parent=59 // pred_check_branch
          %1793 = sbr.rel (%p1791) target = $region72
        $region71: #{tpu_custom_call.1} parent=59 // pred_region
          %s1795 = ssub.s32 128, 128
          %1796 = vsyncadd %s1787, %s1795
          %s1797 = smul.addr %s28, 128
          %s1798 = scalar_lea.hbm %s10, %s1797
          %s1800 = sshll.u32 %s1790, 4
          %s1801 = int_to_ptr.vmem [resolvable:$true] %s1800
          %1803 = dma.vmem_to_hbm [thread:$0]  %s1801, 128, %s1798, %s1787
        $region72: #{tpu_custom_call.1} parent=59 // pred_fallthru
          _
      $region60: #{tpu_custom_call.1} parent=5 // pred_fallthru
        _
      %p1804 = scmp.le.s32.totalorder 2, %s19
      // Predicated region
      $region73: #{tpu_custom_call.1} parent=5 // pred_check
        %p1805 = pneg %p1804
      $region74: #{tpu_custom_call.1} parent=5 // pred_check_branch
        %1807 = sbr.rel (%p1805) target = $region76
      $region75: #{tpu_custom_call.1} parent=5 // pred_region
        %s1808 = ssub.s32 %s19, 2
        // Predicated region
        $region77: #{tpu_custom_call.1} parent=75 // pred_check
          %p1809 = pneg %p305
        $region78: #{tpu_custom_call.1} parent=75 // pred_check_branch
          %1811 = sbr.rel (%p1809) target = $region80
        $region79: #{tpu_custom_call.1} parent=75 // pred_region
          %s1812 = sand.u32 %s290, 1
          %s1813 = scalar_lea.sflag [#allocation4], %s1812
          %s1814 = sand.u32 %s290, 1
          %s1815 = smul.addr %s1814, 8
          %s1816 = scalar_lea.vmem [#allocation3], %s1815
          %1817 = dma.done %s1813, 128
        $region80: #{tpu_custom_call.1} parent=75 // pred_fallthru
          _
      $region76: #{tpu_custom_call.1} parent=5 // pred_fallthru
        _
    $region6: #{tpu_custom_call.1} parent=1 // loop_footer
      %s23 = sadd.s32 1, %s19
    $region7: #{tpu_custom_call.1} parent=1 // loop_footer_branch
      %18 = sbr.rel target = $region3
    $region8: #{tpu_custom_call.1} parent=1 // loop_exit
      _
    %1818 = vsyncpa [#allocation4], 1
    %s1819 = scalar_lea.sflag [#allocation4], 1
    %1820 = vsyncpa %s1819, 1

</llo_original>
